<compile_context>
chip_gen: v6e
topology: v6e:2x2x1
jax: 0.10.0
libtpu: 0.0.40
codegen_flags: <defaults>
</compile_context>

<pallas_src>
import math
import numpy as np
import jax
import jax.numpy as jnp
from jax import lax
from jax.experimental import pallas as pl
from jax.experimental.pallas import tpu as pltpu


def _num_samples(L, factor):
    # factor * ceil(log(L)), clamped to L  (matches the PyTorch forward)
    return min(int(factor * math.ceil(math.log(L))), L)


def _vmem_limit_bytes():
    """Generation-aware scoped-VMEM limit (~70% of physical, capped)."""
    cap = 128 * 1024 * 1024
    try:
        info = pltpu.get_tpu_info()
        cap = int(getattr(info, "vmem_capacity_bytes", cap))
    except Exception:
        pass
    return int(min(0.70 * cap, 96 * 1024 * 1024))


def _pick_k_tile(L_K, max_tile=512):
    """Largest multiple-of-128 divisor of L_K (lane-aligned cnt tiles); else L_K."""
    if L_K <= max_tile:
        return L_K
    best = None
    t = 128
    while t <= max_tile:
        if L_K % t == 0:
            best = t
        t += 128
    return best if best is not None else L_K   # fallback: whole K resident


def _pick_head_group(B, H, D, L_Q, L_K, n_top, tk, out_itemsize, vmem_limit):
    """Pick Hg | H so Hg*D >= 128 lanes per step while the double-buffered
    working set (inputs x2 + scratch + temps) of BOTH kernels fits in VMEM."""
    divisors = [d for d in range(1, H + 1) if H % d == 0]
    budget = int(0.55 * vmem_limit)          # headroom for compiler scratch

    def k1_bytes(g):
        return (2 * g * L_Q * D * 2          # Q tile (bf16, double-buffered)
                + 2 * g * tk * D * 2         # K tile (bf16)
                + 2 * L_Q * tk * 4           # cnt tile (f32)
                + 2 * g * L_Q * 4            # running max/sum scratch
                + 2 * g * L_Q * 4            # M output
                + 2 * g * L_Q * tk * 4)      # scores temp + headroom

    def k2_bytes(g):
        return (2 * g * n_top * D * 2                      # Q_top
                + 2 * 2 * g * L_K * D * 2                  # K, V
                + 2 * L_Q * g * D * out_itemsize           # ctx in
                + 2 * L_Q * g * D * out_itemsize           # out
                + (g * n_top * L_K + g * L_Q * n_top + 2 * g * L_Q * D) * 4)

    def fits(g):
        return max(k1_bytes(g), k2_bytes(g)) <= budget

    hg = next((d for d in divisors if d * D >= 128), H)
    while hg > 1 and not fits(hg):
        hg = max(d for d in divisors if d < hg)
    # keep >= 2 parallel grid points so both TensorCores stay busy (v7x megacore)
    if B * (H // hg) < 2:
        cands = [d for d in divisors if d < hg and B * (H // d) >= 2]
        if cands:
            hg = max(cands)
    return hg


# ----------------------------- Kernel 1 ------------------------------------ #
def _make_prob_m_kernel(L_K, Hg):
    inv_lk = 1.0 / float(L_K)

    def kernel(q_ref, k_ref, cnt_ref, m_ref, mmax_sc, ssum_sc):
        kt = pl.program_id(2)

        @pl.when(kt == 0)
        def _():
            mmax_sc[...] = jnp.full_like(mmax_sc, -1e30)
            ssum_sc[...] = jnp.zeros_like(ssum_sc)

        q = q_ref[0]                        # (Hg, L_Q, D) bf16
        kb = k_ref[0]                       # (Hg, tk, D)  bf16
        cnt = cnt_ref[...]                  # (L_Q, tk)    f32 sampled multiplicities

        # scores = Q @ K^T for this K tile (bf16 MXU inputs, f32 accumulation)
        scores = jnp.einsum('hqd,hkd->hqk', q, kb,
                            preferred_element_type=jnp.float32)   # (Hg, L_Q, tk)

        # additive bias instead of a full-size masked select; derived once per
        # tile from cnt (shared across the Hg packed heads)
        bias = jnp.where(cnt > 0.0, 0.0, -1e30)                   # (L_Q, tk)

        # running max over sampled keys / running duplicate-weighted sum
        mmax_sc[...] = jnp.maximum(mmax_sc[...],
                                   jnp.max(scores + bias[None], axis=-1))
        ssum_sc[...] = ssum_sc[...] + jnp.sum(scores * cnt[None], axis=-1)

        @pl.when(kt == pl.num_programs(2) - 1)
        def _():
            m_ref[0, 0] = mmax_sc[...] - ssum_sc[...] * inv_lk    # lane-major M

    return kernel


# ----------------------------- Kernel 2 ------------------------------------ #
def _make_sparse_attn_kernel(L_Q, L_K, n_top, Hg, D):
    def kernel(qr_ref, k_ref, v_ref, idx_ref, ctx_ref, out_ref):
        qr = qr_ref[0]                  # (Hg, n_top, D) bf16, scale already folded in
        kb = k_ref[0]                   # (Hg, L_K, D)  bf16
        vb = v_ref[0]                   # (Hg, L_K, D)  bf16
        idx = idx_ref[0, 0]             # (Hg, n_top)   int32 top query positions
        ctx = ctx_ref[0, 0]             # (L_Q, Hg*D)   lane-dense initial context

        # scores = (scale*Q_top) @ K^T
        scores = jnp.einsum('hud,hkd->huk', qr, kb,
                            preferred_element_type=jnp.float32)    # (Hg, n_top, L_K)

        # ProbMask: keys with position > selected-query position are masked
        col = lax.broadcasted_iota(jnp.int32, (Hg, n_top, L_K), 2)
        scores = jnp.where(col > idx[:, :, None], -1e30, scores)

        # softmax over keys; reciprocal on the EUP (approx is plenty for weights)
        m = jnp.max(scores, axis=-1, keepdims=True)
        p = jnp.exp(scores - m)
        attn = p * pl.reciprocal(jnp.sum(p, axis=-1, keepdims=True), approx=True)

        upd = jnp.einsum('huk,hkd->hud', attn.astype(jnp.bfloat16), vb,
                         preferred_element_type=jnp.float32)        # (Hg, n_top, D)

        # scatter: rows `idx` of ctx are replaced by `upd` (top-k indices unique)
        rows = lax.broadcasted_iota(jnp.int32, (Hg, L_Q, n_top), 1)
        onehot = (rows == idx[:, None, :]).astype(jnp.float32)       # (Hg, L_Q, n_top)
        scattered = jnp.einsum('hqu,hud->hqd', onehot, upd,
                               preferred_element_type=jnp.float32)   # (Hg, L_Q, D)
        sel = jnp.max(onehot, axis=-1, keepdims=True)                # (Hg, L_Q, 1)

        # assemble a lane-dense (L_Q, Hg*D) result with static per-head slices
        chunks = []
        for h in range(Hg):
            blended = jnp.where(sel[h] > 0.0, scattered[h],
                                ctx[:, h * D:(h + 1) * D].astype(jnp.float32))
            chunks.append(blended)
        out_ref[0, 0] = jnp.concatenate(chunks, axis=-1).astype(out_ref.dtype)

    return kernel


# ------------------------------ Wrapper ------------------------------------ #
def prob_attention(queries, keys, values, attn_mask=None, *, factor=5, scale=None,
                   index_sample=None, sample_key=None):
    """mask_flag=True, output_attention=False path of ProbAttention.forward."""
    B, L_Q, H, D = queries.shape
    _, L_K, _, _ = keys.shape
    _, L_V, _, _ = values.shape
    assert L_Q == L_K == L_V, "mask_flag=True initial context requires L_Q == L_K == L_V"
    out_dtype = queries.dtype
    out_itemsize = jnp.dtype(out_dtype).itemsize

    q = jnp.transpose(queries, (0, 2, 1, 3))             # [B,H,L_Q,D]
    k = jnp.transpose(keys, (0, 2, 1, 3))                # [B,H,L_K,D]
    v = jnp.transpose(values, (0, 2, 1, 3))              # [B,H,L_K,D]

    qb = q.astype(jnp.bfloat16)
    kb = k.astype(jnp.bfloat16)
    vb = v.astype(jnp.bfloat16)

    U_part = _num_samples(L_K, factor)   # sample_k
    u = _num_samples(L_Q, factor)        # n_top

    if index_sample is None:
        if sample_key is None:
            sample_key = jax.random.PRNGKey(0)
        index_sample = jax.random.randint(sample_key, (L_Q, U_part), 0, L_K)

    # sampled-key multiplicities per query via scatter-add; shared by all (b,h)
    cnt = jnp.zeros((L_Q, L_K), jnp.float32).at[
        jnp.arange(L_Q)[:, None], index_sample].add(1.0)            # (L_Q, L_K)

    vmem_limit = _vmem_limit_bytes()
    tk = _pick_k_tile(L_K)
    Hg = _pick_head_group(B, H, D, L_Q, L_K, u, tk, out_itemsize, vmem_limit)
    G = H // Hg
    KT = L_K // tk

    cparams1 = pltpu.CompilerParams(
        dimension_semantics=("parallel", "parallel", "arbitrary"),
        vmem_limit_bytes=vmem_limit)
    cparams2 = pltpu.CompilerParams(
        dimension_semantics=("parallel", "parallel"),
        vmem_limit_bytes=vmem_limit)

    # ---- kernel 1: sparsity measure M (streamed over K, lane-major output) ----
    ce1 = pl.CostEstimate(
        flops=2 * B * H * L_Q * L_K * D + 4 * B * H * L_Q * L_K,
        transcendentals=0,
        bytes_accessed=(B * H * L_Q * D * 2 + B * H * L_K * D * 2
                        + B * G * L_Q * L_K * 4 + B * H * L_Q * 4))

    m_out = pl.pallas_call(
        _make_prob_m_kernel(L_K, Hg),
        out_shape=jax.ShapeDtypeStruct((B, G, Hg, L_Q), jnp.float32),
        grid=(B, G, KT),
        in_specs=[
            pl.BlockSpec((1, Hg, L_Q, D), lambda b, g, kt: (b, g, 0, 0)),   # Q (bf16)
            pl.BlockSpec((1, Hg, tk, D), lambda b, g, kt: (b, g, kt, 0)),   # K (bf16)
            pl.BlockSpec((L_Q, tk), lambda b, g, kt: (0, kt)),              # cnt (f32)
        ],
        out_specs=pl.BlockSpec((1, 1, Hg, L_Q), lambda b, g, kt: (b, g, 0, 0)),
        scratch_shapes=[pltpu.VMEM((Hg, L_Q), jnp.float32),   # running max
                        pltpu.VMEM((Hg, L_Q), jnp.float32)],  # running weighted sum
        compiler_params=cparams1,
        cost_estimate=ce1,
    )(qb, kb, cnt)
    M = m_out.reshape(B, H, L_Q)

    # top-u query selection + gather (glue)
    _, M_top = jax.lax.top_k(M, u)                       # [B,H,u]
    M_top = M_top.astype(jnp.int32)
    Q_reduce = jnp.take_along_axis(q, M_top[..., None], axis=2)       # [B,H,u,D]

    scale_val = scale if scale is not None else 1.0 / math.sqrt(D)
    qr = (Q_reduce.astype(jnp.float32) * scale_val).astype(jnp.bfloat16)
    idx = M_top.reshape(B, G, Hg, u)

    # initial context = cumsum(V); packed lane-dense [B, G, L_Q, Hg*D] in out_dtype
    ctx0 = jnp.cumsum(v.astype(jnp.float32), axis=2)                  # [B,H,L_Q,D]
    ctx_packed = jnp.transpose(ctx0.reshape(B, G, Hg, L_Q, D),
                               (0, 1, 3, 2, 4)).reshape(B, G, L_Q, Hg * D)
    ctx_packed = ctx_packed.astype(out_dtype)

    # ---- kernel 2: masked sparse attention + row scatter into context ----
    ce2 = pl.CostEstimate(
        flops=(4 * B * H * u * L_K * D + 2 * B * H * L_Q * u * D
               + 6 * B * H * u * L_K),
        transcendentals=B * H * u * L_K,
        bytes_accessed=(B * H * u * D * 2 + 2 * B * H * L_K * D * 2
                        + B * H * u * 4 + 2 * B * H * L_Q * D * out_itemsize))

    out_packed = pl.pallas_call(
        _make_sparse_attn_kernel(L_Q, L_K, u, Hg, D),
        out_shape=jax.ShapeDtypeStruct((B, G, L_Q, Hg * D), out_dtype),
        grid=(B, G),
        in_specs=[
            pl.BlockSpec((1, Hg, u, D), lambda b, g: (b, g, 0, 0)),      # Q_top (bf16)
            pl.BlockSpec((1, Hg, L_K, D), lambda b, g: (b, g, 0, 0)),    # K (bf16)
            pl.BlockSpec((1, Hg, L_K, D), lambda b, g: (b, g, 0, 0)),    # V (bf16)
            pl.BlockSpec((1, 1, Hg, u), lambda b, g: (b, g, 0, 0)),      # indices (i32)
            pl.BlockSpec((1, 1, L_Q, Hg * D), lambda b, g: (b, g, 0, 0)),  # ctx (lane-dense)
        ],
        out_specs=pl.BlockSpec((1, 1, L_Q, Hg * D), lambda b, g: (b, g, 0, 0)),
        input_output_aliases={4: 0},        # ctx buffer is reused as the output
        compiler_params=cparams2,
        cost_estimate=ce2,
    )(qr, kb, vb, idx, ctx_packed)

    # unpack [B, G, L_Q, Hg*D] -> [B, L_Q, H, D]
    out = jnp.transpose(out_packed.reshape(B, G, L_Q, Hg, D),
                        (0, 2, 1, 3, 4)).reshape(B, L_Q, H, D)
    return out, None   # output_attention=False -> attn is None


# --------------------------- Pure-JAX reference ----------------------------- #
def prob_attention_ref(queries, keys, values, index_sample, factor=5, scale=None):
    """Reference using the same math (bf16 MXU inputs, f32 accumulation)."""
    B, L_Q, H, D = queries.shape
    L_K = keys.shape[1]
    q = jnp.transpose(queries, (0, 2, 1, 3)).astype(jnp.float32)
    k = jnp.transpose(keys, (0, 2, 1, 3)).astype(jnp.float32)
    v = jnp.transpose(values, (0, 2, 1, 3)).astype(jnp.float32)
    u = _num_samples(L_Q, factor)
    scale_val = scale if scale is not None else 1.0 / math.sqrt(D)

    cnt = jnp.zeros((L_Q, L_K), jnp.float32).at[
        jnp.arange(L_Q)[:, None], index_sample].add(1.0)
    bias = jnp.where(cnt > 0.0, 0.0, -1e30)

    qb = q.astype(jnp.bfloat16)
    kb = k.astype(jnp.bfloat16)
    vb = v.astype(jnp.bfloat16)

    scores_full = jnp.einsum('bhqd,bhkd->bhqk', qb, kb,
                             preferred_element_type=jnp.float32)
    smax = jnp.max(scores_full + bias[None, None], axis=-1)
    ssum = jnp.sum(scores_full * cnt[None, None], axis=-1)
    M = smax - ssum / L_K

    _, M_top = jax.lax.top_k(M, u)
    Q_reduce = jnp.take_along_axis(q, M_top[..., None], axis=2)
    qr = (Q_reduce * scale_val).astype(jnp.bfloat16)
    scores = jnp.einsum('bhue,bhke->bhuk', qr, kb, preferred_element_type=jnp.float32)
    mask = jnp.arange(L_K)[None, None, None, :] > M_top[..., None]
    scores = jnp.where(mask, -1e30, scores)
    attn = jax.nn.softmax(scores, axis=-1)
    upd = jnp.einsum('bhuk,bhkd->bhud', attn.astype(jnp.bfloat16), vb,
                     preferred_element_type=jnp.float32)
    ctx = jnp.cumsum(v, axis=2)
    b_idx = jnp.arange(B)[:, None, None]
    h_idx = jnp.arange(H)[None, :, None]
    ctx = ctx.at[b_idx, h_idx, M_top, :].set(upd)
    return jnp.transpose(ctx, (0, 2, 1, 3)).astype(queries.dtype)


# ------------------------------- Main --------------------------------------- #
if __name__ == "__main__":
    B, L, H, D = 2, 16, 4, 32
    key = jax.random.PRNGKey(0)
    kq, kk, kv, ks = jax.random.split(key, 4)
    queries = jax.random.normal(kq, (B, L, H, D), dtype=jnp.float32)
    keys = jax.random.normal(kk, (B, L, H, D), dtype=jnp.float32)
    values = jax.random.normal(kv, (B, L, H, D), dtype=jnp.float32)

    # deterministic "random" key sampling (torch.randint equivalent)
    U_part = _num_samples(L, 5)
    index_sample = jax.random.randint(ks, (L, U_part), 0, L)

    fn = jax.jit(prob_attention, static_argnames=("factor", "scale"))
    out, attn = fn(queries, keys, values, None, index_sample=index_sample)
    out = jax.block_until_ready(out)
    assert out.shape == (B, L, H, D) and attn is None

    ref = jax.block_until_ready(
        prob_attention_ref(queries, keys, values, index_sample))
    assert np.allclose(np.asarray(out), np.asarray(ref), rtol=2e-2, atol=2e-2), \
        "Pallas ProbAttention does not match JAX reference"

    print("KERNEL_OK")
</pallas_src>

<mosaic_0001>
module attributes {stable_mosaic.version = 11 : i64} {
  func.func private @main(%arg0: i32) attributes {dimension_semantics = [#tpu.dimension_semantics<core_parallel>], iteration_bounds = array<i64: 2>, tpu.core_type = #tpu.core_type<sc_scalar_subcore>, window_params = []} {
    return
  }
}

module attributes {stable_mosaic.version = 11 : i64} {
  func.func private @main(%arg0: i32) attributes {dimension_semantics = [#tpu.dimension_semantics<core_parallel>], iteration_bounds = array<i64: 2>, tpu.core_type = #tpu.core_type<sc_scalar_subcore>, window_params = []} {
    return
  }
}

module attributes {stable_mosaic.version = 11 : i64} {
  func.func @kernel(%arg0: i32, %arg1: i32, %arg2: i32, %arg3: memref<1x4x16x32xbf16, #tpu.memory_space<vmem>>, %arg4: memref<1x4x16x32xbf16, #tpu.memory_space<vmem>>, %arg5: memref<16x16xf32, #tpu.memory_space<vmem>>, %arg6: memref<1x1x4x16xf32, #tpu.memory_space<vmem>>, %arg7: memref<4x16xf32, #tpu.memory_space<vmem>>, %arg8: memref<4x16xf32, #tpu.memory_space<vmem>>) attributes {dimension_semantics = [#tpu.dimension_semantics<parallel>, #tpu.dimension_semantics<parallel>, #tpu.dimension_semantics<arbitrary>], iteration_bounds = array<i64: 2, 1, 1>, scalar_prefetch = 0 : i64, scratch_operands = 2 : i64, tpu.core_type = #tpu.core_type<tc>, window_params = [{transform_indices = @transform_0, window_bounds = array<i64: 1, 4, 16, 32>}, {transform_indices = @transform_1, window_bounds = array<i64: 1, 4, 16, 32>}, {transform_indices = @transform_2, window_bounds = array<i64: 16, 16>}, {transform_indices = @transform_3, window_bounds = array<i64: 1, 1, 4, 16>}]} {
    %c0_i32 = arith.constant 0 : i32
    %0 = arith.cmpi eq, %arg2, %c0_i32 : i32
    %1 = arith.extui %0 : i1 to i32
    %c0_i32_0 = arith.constant 0 : i32
    %2 = arith.cmpi ne, %1, %c0_i32_0 : i32
    scf.if %2 {
      %cst_25 = arith.constant -1.000000e+30 : f32
      %31 = vector.broadcast %cst_25 : f32 to vector<4x16xf32>
      %c0_26 = arith.constant 0 : index
      %c0_27 = arith.constant 0 : index
      %32 = vector.load %arg7[%c0_26, %c0_27] : memref<4x16xf32, #tpu.memory_space<vmem>>, vector<4x16xf32>
      tpu.vector_store %arg7[%c0_26, %c0_27], %31 {strides = array<i32>} : memref<4x16xf32, #tpu.memory_space<vmem>>, vector<4x16xf32>,
      %cst_28 = arith.constant 0.000000e+00 : f32
      %33 = vector.broadcast %cst_28 : f32 to vector<4x16xf32>
      %c0_29 = arith.constant 0 : index
      %c0_30 = arith.constant 0 : index
      %34 = vector.load %arg8[%c0_29, %c0_30] : memref<4x16xf32, #tpu.memory_space<vmem>>, vector<4x16xf32>
      tpu.vector_store %arg8[%c0_29, %c0_30], %33 {strides = array<i32>} : memref<4x16xf32, #tpu.memory_space<vmem>>, vector<4x16xf32>,
    } else {
    }
    %c0 = arith.constant 0 : index
    %c0_1 = arith.constant 0 : index
    %c0_2 = arith.constant 0 : index
    %c0_3 = arith.constant 0 : index
    %3 = vector.load %arg3[%c0, %c0_1, %c0_2, %c0_3] : memref<1x4x16x32xbf16, #tpu.memory_space<vmem>>, vector<1x4x16x32xbf16>
    %4 = vector.shape_cast %3 : vector<1x4x16x32xbf16> to vector<4x16x32xbf16>
    %c0_4 = arith.constant 0 : index
    %c0_5 = arith.constant 0 : index
    %c0_6 = arith.constant 0 : index
    %c0_7 = arith.constant 0 : index
    %5 = vector.load %arg4[%c0_4, %c0_5, %c0_6, %c0_7] : memref<1x4x16x32xbf16, #tpu.memory_space<vmem>>, vector<1x4x16x32xbf16>
    %6 = vector.shape_cast %5 : vector<1x4x16x32xbf16> to vector<4x16x32xbf16>
    %c0_8 = arith.constant 0 : index
    %c0_9 = arith.constant 0 : index
    %7 = vector.load %arg5[%c0_8, %c0_9] : memref<16x16xf32, #tpu.memory_space<vmem>>, vector<16x16xf32>
    "tpu.trace_start"() <{level = 10 : i32, message = "hqd,hkd->hqk"}> : () -> ()
    %cst = arith.constant dense<0.000000e+00> : vector<4x16x16xf32>
    %8 = tpu.matmul %4, %6, %cst {dimension_numbers = #tpu.dot_dimension_numbers<[2], [2], [1], [1], [0, 0, 0, 1, 1, 1], [0], [0]>} : vector<4x16x32xbf16>, vector<4x16x32xbf16>, vector<4x16x16xf32> -> vector<4x16x16xf32>
    %cst_10 = arith.constant 0.000000e+00 : f32
    "tpu.trace_stop"() : () -> ()
    %9 = vector.broadcast %cst_10 : f32 to vector<16x16xf32>
    %10 = arith.cmpf ogt, %7, %9 : vector<16x16xf32>
    %cst_11 = arith.constant 0.000000e+00 : f32
    %cst_12 = arith.constant -1.000000e+30 : f32
    %11 = vector.broadcast %cst_11 : f32 to vector<16x16xf32>
    %12 = vector.broadcast %cst_12 : f32 to vector<16x16xf32>
    %13 = arith.select %10, %11, %12 : vector<16x16xi1>, vector<16x16xf32>
    %c0_13 = arith.constant 0 : index
    %c0_14 = arith.constant 0 : index
    %14 = vector.load %arg7[%c0_13, %c0_14] : memref<4x16xf32, #tpu.memory_space<vmem>>, vector<4x16xf32>
    %15 = vector.shape_cast %13 : vector<16x16xf32> to vector<1x16x16xf32>
    %16 = vector.broadcast %15 : vector<1x16x16xf32> to vector<4x16x16xf32>
    %17 = arith.addf %8, %16 : vector<4x16x16xf32>
    %cst_15 = arith.constant dense<0xFF800000> : vector<4x16xf32>
    %18 = vector.multi_reduction <maximumf>, %17, %cst_15 [2] : vector<4x16x16xf32> to vector<4x16xf32>
    %19 = arith.maximumf %14, %18 : vector<4x16xf32>
    %c0_16 = arith.constant 0 : index
    %c0_17 = arith.constant 0 : index
    %20 = vector.load %arg7[%c0_16, %c0_17] : memref<4x16xf32, #tpu.memory_space<vmem>>, vector<4x16xf32>
    tpu.vector_store %arg7[%c0_16, %c0_17], %19 {strides = array<i32>} : memref<4x16xf32, #tpu.memory_space<vmem>>, vector<4x16xf32>,
    %c0_18 = arith.constant 0 : index
    %c0_19 = arith.constant 0 : index
    %21 = vector.load %arg8[%c0_18, %c0_19] : memref<4x16xf32, #tpu.memory_space<vmem>>, vector<4x16xf32>
    %22 = vector.shape_cast %7 : vector<16x16xf32> to vector<1x16x16xf32>
    %23 = vector.broadcast %22 : vector<1x16x16xf32> to vector<4x16x16xf32>
    %24 = arith.mulf %8, %23 : vector<4x16x16xf32>
    %cst_20 = arith.constant dense<0.000000e+00> : vector<4x16xf32>
    %25 = vector.multi_reduction <add>, %24, %cst_20 [2] : vector<4x16x16xf32> to vector<4x16xf32>
    %26 = arith.addf %21, %25 : vector<4x16xf32>
    %c0_21 = arith.constant 0 : index
    %c0_22 = arith.constant 0 : index
    %27 = vector.load %arg8[%c0_21, %c0_22] : memref<4x16xf32, #tpu.memory_space<vmem>>, vector<4x16xf32>
    tpu.vector_store %arg8[%c0_21, %c0_22], %26 {strides = array<i32>} : memref<4x16xf32, #tpu.memory_space<vmem>>, vector<4x16xf32>,
    %c0_i32_23 = arith.constant 0 : i32
    %28 = arith.cmpi eq, %arg2, %c0_i32_23 : i32
    %29 = arith.extui %28 : i1 to i32
    %c0_i32_24 = arith.constant 0 : i32
    %30 = arith.cmpi ne, %29, %c0_i32_24 : i32
    scf.if %30 {
      %c0_25 = arith.constant 0 : index
      %c0_26 = arith.constant 0 : index
      %31 = vector.load %arg7[%c0_25, %c0_26] : memref<4x16xf32, #tpu.memory_space<vmem>>, vector<4x16xf32>
      %c0_27 = arith.constant 0 : index
      %c0_28 = arith.constant 0 : index
      %32 = vector.load %arg8[%c0_27, %c0_28] : memref<4x16xf32, #tpu.memory_space<vmem>>, vector<4x16xf32>
      %cst_29 = arith.constant 6.250000e-02 : f32
      %33 = vector.broadcast %cst_29 : f32 to vector<4x16xf32>
      %34 = arith.mulf %32, %33 : vector<4x16xf32>
      %35 = arith.subf %31, %34 : vector<4x16xf32>
      %c0_30 = arith.constant 0 : index
      %c0_31 = arith.constant 0 : index
      %c0_32 = arith.constant 0 : index
      %c0_33 = arith.constant 0 : index
      %36 = vector.load %arg6[%c0_30, %c0_31, %c0_32, %c0_33] : memref<1x1x4x16xf32, #tpu.memory_space<vmem>>, vector<1x1x4x16xf32>
      %37 = vector.shape_cast %36 : vector<1x1x4x16xf32> to vector<4x16xf32>
      %38 = vector.shape_cast %35 : vector<4x16xf32> to vector<1x1x4x16xf32>
      tpu.vector_store %arg6[%c0_30, %c0_31, %c0_32, %c0_33], %38 {strides = array<i32>} : memref<1x1x4x16xf32, #tpu.memory_space<vmem>>, vector<1x1x4x16xf32>,
    } else {
    }
    return
  }
  func.func @transform_0(%arg0: i32, %arg1: i32, %arg2: i32) -> (i32, i32, i32, i32) {
    %c0_i32 = arith.constant 0 : i32
    %c0_i32_0 = arith.constant 0 : i32
    %c0_i32_1 = arith.constant 0 : i32
    return %arg0, %arg1, %c0_i32, %c0_i32_0 : i32, i32, i32, i32
  }
  func.func @transform_1(%arg0: i32, %arg1: i32, %arg2: i32) -> (i32, i32, i32, i32) {
    %c0_i32 = arith.constant 0 : i32
    %c0_i32_0 = arith.constant 0 : i32
    return %arg0, %arg1, %arg2, %c0_i32 : i32, i32, i32, i32
  }
  func.func @transform_2(%arg0: i32, %arg1: i32, %arg2: i32) -> (i32, i32) {
    %c0_i32 = arith.constant 0 : i32
    %c0_i32_0 = arith.constant 0 : i32
    return %c0_i32, %arg2 : i32, i32
  }
  func.func @transform_3(%arg0: i32, %arg1: i32, %arg2: i32) -> (i32, i32, i32, i32) {
    %c0_i32 = arith.constant 0 : i32
    %c0_i32_0 = arith.constant 0 : i32
    %c0_i32_1 = arith.constant 0 : i32
    return %arg0, %arg1, %c0_i32, %c0_i32_0 : i32, i32, i32, i32
  }
}

module attributes {stable_mosaic.version = 11 : i64} {
  func.func @kernel(%arg0: i32, %arg1: i32, %arg2: memref<1x4x15x32xbf16, #tpu.memory_space<vmem>>, %arg3: memref<1x4x16x32xbf16, #tpu.memory_space<vmem>>, %arg4: memref<1x4x16x32xbf16, #tpu.memory_space<vmem>>, %arg5: memref<1x1x4x15xi32, #tpu.memory_space<vmem>>, %arg6: memref<1x1x16x128xf32, #tpu.memory_space<vmem>>, %arg7: memref<1x1x16x128xf32, #tpu.memory_space<vmem>>) attributes {dimension_semantics = [#tpu.dimension_semantics<parallel>, #tpu.dimension_semantics<parallel>], iteration_bounds = array<i64: 2, 1>, scalar_prefetch = 0 : i64, scratch_operands = 0 : i64, tpu.core_type = #tpu.core_type<tc>, window_params = [{transform_indices = @transform_0, window_bounds = array<i64: 1, 4, 15, 32>}, {transform_indices = @transform_1, window_bounds = array<i64: 1, 4, 16, 32>}, {transform_indices = @transform_2, window_bounds = array<i64: 1, 4, 16, 32>}, {transform_indices = @transform_3, window_bounds = array<i64: 1, 1, 4, 15>}, {transform_indices = @transform_4, window_bounds = array<i64: 1, 1, 16, 128>}, {transform_indices = @transform_5, window_bounds = array<i64: 1, 1, 16, 128>}]} {
    %c0 = arith.constant 0 : index
    %c0_0 = arith.constant 0 : index
    %c0_1 = arith.constant 0 : index
    %c0_2 = arith.constant 0 : index
    %0 = vector.load %arg2[%c0, %c0_0, %c0_1, %c0_2] : memref<1x4x15x32xbf16, #tpu.memory_space<vmem>>, vector<1x4x15x32xbf16>
    %1 = vector.shape_cast %0 : vector<1x4x15x32xbf16> to vector<4x15x32xbf16>
    %c0_3 = arith.constant 0 : index
    %c0_4 = arith.constant 0 : index
    %c0_5 = arith.constant 0 : index
    %c0_6 = arith.constant 0 : index
    %2 = vector.load %arg3[%c0_3, %c0_4, %c0_5, %c0_6] : memref<1x4x16x32xbf16, #tpu.memory_space<vmem>>, vector<1x4x16x32xbf16>
    %3 = vector.shape_cast %2 : vector<1x4x16x32xbf16> to vector<4x16x32xbf16>
    %c0_7 = arith.constant 0 : index
    %c0_8 = arith.constant 0 : index
    %c0_9 = arith.constant 0 : index
    %c0_10 = arith.constant 0 : index
    %4 = vector.load %arg4[%c0_7, %c0_8, %c0_9, %c0_10] : memref<1x4x16x32xbf16, #tpu.memory_space<vmem>>, vector<1x4x16x32xbf16>
    %5 = vector.shape_cast %4 : vector<1x4x16x32xbf16> to vector<4x16x32xbf16>
    %c0_11 = arith.constant 0 : index
    %c0_12 = arith.constant 0 : index
    %c0_13 = arith.constant 0 : index
    %c0_14 = arith.constant 0 : index
    %6 = vector.load %arg5[%c0_11, %c0_12, %c0_13, %c0_14] : memref<1x1x4x15xi32, #tpu.memory_space<vmem>>, vector<1x1x4x15xi32>
    %7 = vector.shape_cast %6 : vector<1x1x4x15xi32> to vector<4x15xi32>
    %c0_15 = arith.constant 0 : index
    %c0_16 = arith.constant 0 : index
    %c0_17 = arith.constant 0 : index
    %c0_18 = arith.constant 0 : index
    %8 = vector.load %arg6[%c0_15, %c0_16, %c0_17, %c0_18] : memref<1x1x16x128xf32, #tpu.memory_space<vmem>>, vector<1x1x16x128xf32>
    %9 = vector.shape_cast %8 : vector<1x1x16x128xf32> to vector<16x128xf32>
    "tpu.trace_start"() <{level = 10 : i32, message = "hud,hkd->huk"}> : () -> ()
    %cst = arith.constant dense<0.000000e+00> : vector<4x15x16xf32>
    %10 = tpu.matmul %1, %3, %cst {dimension_numbers = #tpu.dot_dimension_numbers<[2], [2], [1], [1], [0, 0, 0, 1, 1, 1], [0], [0]>} : vector<4x15x32xbf16>, vector<4x16x32xbf16>, vector<4x15x16xf32> -> vector<4x15x16xf32>
    "tpu.trace_stop"() : () -> ()
    %11 = tpu.iota {dimensions = array<i32: 2>} : vector<4x15x16xi32>
    %12 = vector.shape_cast %7 : vector<4x15xi32> to vector<4x15x1xi32>
    %13 = vector.broadcast %12 : vector<4x15x1xi32> to vector<4x15x16xi32>
    %14 = arith.cmpi sgt, %11, %13 : vector<4x15x16xi32>
    %cst_19 = arith.constant -1.000000e+30 : f32
    %15 = vector.broadcast %cst_19 : f32 to vector<4x15x16xf32>
    %16 = arith.select %14, %15, %10 : vector<4x15x16xi1>, vector<4x15x16xf32>
    %cst_20 = arith.constant dense<0xFF800000> : vector<4x15xf32>
    %17 = vector.multi_reduction <maximumf>, %16, %cst_20 [2] : vector<4x15x16xf32> to vector<4x15xf32>
    %18 = vector.shape_cast %17 : vector<4x15xf32> to vector<4x15x1xf32>
    %19 = vector.broadcast %18 : vector<4x15x1xf32> to vector<4x15x16xf32>
    %20 = arith.subf %16, %19 : vector<4x15x16xf32>
    %21 = math.exp %20 : vector<4x15x16xf32>
    %cst_21 = arith.constant dense<0.000000e+00> : vector<4x15xf32>
    %22 = vector.multi_reduction <add>, %21, %cst_21 [2] : vector<4x15x16xf32> to vector<4x15xf32>
    %23 = vector.shape_cast %22 : vector<4x15xf32> to vector<4x15x1xf32>
    %24 = tpu.reciprocal %23 {approx = true} : vector<4x15x1xf32> -> vector<4x15x1xf32>
    %25 = vector.broadcast %24 : vector<4x15x1xf32> to vector<4x15x16xf32>
    %26 = arith.mulf %21, %25 : vector<4x15x16xf32>
    %27 = arith.truncf %26 : vector<4x15x16xf32> to vector<4x15x16xbf16>
    "tpu.trace_start"() <{level = 10 : i32, message = "huk,hkd->hud"}> : () -> ()
    %cst_22 = arith.constant dense<0.000000e+00> : vector<4x15x32xf32>
    %28 = tpu.matmul %27, %5, %cst_22 {dimension_numbers = #tpu.dot_dimension_numbers<[2], [1], [1], [2], [0, 0, 0, 1, 1, 2], [0], [0]>} : vector<4x15x16xbf16>, vector<4x16x32xbf16>, vector<4x15x32xf32> -> vector<4x15x32xf32>
    "tpu.trace_stop"() : () -> ()
    %29 = tpu.iota {dimensions = array<i32: 1>} : vector<4x16x15xi32>
    %30 = vector.shape_cast %7 : vector<4x15xi32> to vector<4x1x15xi32>
    %31 = vector.broadcast %30 : vector<4x1x15xi32> to vector<4x16x15xi32>
    %32 = arith.cmpi eq, %29, %31 : vector<4x16x15xi32>
    %33 = arith.extui %32 : vector<4x16x15xi1> to vector<4x16x15xi32>
    %34 = arith.sitofp %33 : vector<4x16x15xi32> to vector<4x16x15xf32>
    "tpu.trace_start"() <{level = 10 : i32, message = "hqu,hud->hqd"}> : () -> ()
    %cst_23 = arith.constant dense<0.000000e+00> : vector<4x16x32xf32>
    %35 = tpu.matmul %34, %28, %cst_23 {dimension_numbers = #tpu.dot_dimension_numbers<[2], [1], [1], [2], [0, 0, 0, 1, 1, 2], [0], [0]>} : vector<4x16x15xf32>, vector<4x15x32xf32>, vector<4x16x32xf32> -> vector<4x16x32xf32>
    "tpu.trace_stop"() : () -> ()
    %cst_24 = arith.constant dense<0xFF800000> : vector<4x16xf32>
    %36 = vector.multi_reduction <maximumf>, %34, %cst_24 [2] : vector<4x16x15xf32> to vector<4x16xf32>
    %37 = vector.shape_cast %36 : vector<4x16xf32> to vector<4x16x1xf32>
    %38 = vector.extract_strided_slice %37 {offsets = [0, 0, 0], sizes = [1, 16, 1], strides = [1, 1, 1]} : vector<4x16x1xf32> to vector<1x16x1xf32>
    %39 = vector.shape_cast %38 : vector<1x16x1xf32> to vector<16x1xf32>
    %cst_25 = arith.constant 0.000000e+00 : f32
    %40 = vector.broadcast %cst_25 : f32 to vector<16x1xf32>
    %41 = arith.cmpf ogt, %39, %40 : vector<16x1xf32>
    %42 = vector.extract_strided_slice %35 {offsets = [0, 0, 0], sizes = [1, 16, 32], strides = [1, 1, 1]} : vector<4x16x32xf32> to vector<1x16x32xf32>
    %43 = vector.shape_cast %42 : vector<1x16x32xf32> to vector<16x32xf32>
    %44 = vector.extract_strided_slice %9 {offsets = [0, 0], sizes = [16, 32], strides = [1, 1]} : vector<16x128xf32> to vector<16x32xf32>
    %45 = vector.shape_cast %41 : vector<16x1xi1> to vector<16x1xi1>
    %46 = vector.broadcast %45 : vector<16x1xi1> to vector<16x32xi1>
    %47 = arith.select %46, %43, %44 : vector<16x32xi1>, vector<16x32xf32>
    %48 = vector.extract_strided_slice %37 {offsets = [1, 0, 0], sizes = [1, 16, 1], strides = [1, 1, 1]} : vector<4x16x1xf32> to vector<1x16x1xf32>
    %49 = vector.shape_cast %48 : vector<1x16x1xf32> to vector<16x1xf32>
    %cst_26 = arith.constant 0.000000e+00 : f32
    %50 = vector.broadcast %cst_26 : f32 to vector<16x1xf32>
    %51 = arith.cmpf ogt, %49, %50 : vector<16x1xf32>
    %52 = vector.extract_strided_slice %35 {offsets = [1, 0, 0], sizes = [1, 16, 32], strides = [1, 1, 1]} : vector<4x16x32xf32> to vector<1x16x32xf32>
    %53 = vector.shape_cast %52 : vector<1x16x32xf32> to vector<16x32xf32>
    %54 = vector.extract_strided_slice %9 {offsets = [0, 32], sizes = [16, 32], strides = [1, 1]} : vector<16x128xf32> to vector<16x32xf32>
    %55 = vector.shape_cast %51 : vector<16x1xi1> to vector<16x1xi1>
    %56 = vector.broadcast %55 : vector<16x1xi1> to vector<16x32xi1>
    %57 = arith.select %56, %53, %54 : vector<16x32xi1>, vector<16x32xf32>
    %58 = vector.extract_strided_slice %37 {offsets = [2, 0, 0], sizes = [1, 16, 1], strides = [1, 1, 1]} : vector<4x16x1xf32> to vector<1x16x1xf32>
    %59 = vector.shape_cast %58 : vector<1x16x1xf32> to vector<16x1xf32>
    %cst_27 = arith.constant 0.000000e+00 : f32
    %60 = vector.broadcast %cst_27 : f32 to vector<16x1xf32>
    %61 = arith.cmpf ogt, %59, %60 : vector<16x1xf32>
    %62 = vector.extract_strided_slice %35 {offsets = [2, 0, 0], sizes = [1, 16, 32], strides = [1, 1, 1]} : vector<4x16x32xf32> to vector<1x16x32xf32>
    %63 = vector.shape_cast %62 : vector<1x16x32xf32> to vector<16x32xf32>
    %64 = vector.extract_strided_slice %9 {offsets = [0, 64], sizes = [16, 32], strides = [1, 1]} : vector<16x128xf32> to vector<16x32xf32>
    %65 = vector.shape_cast %61 : vector<16x1xi1> to vector<16x1xi1>
    %66 = vector.broadcast %65 : vector<16x1xi1> to vector<16x32xi1>
    %67 = arith.select %66, %63, %64 : vector<16x32xi1>, vector<16x32xf32>
    %68 = vector.extract_strided_slice %37 {offsets = [3, 0, 0], sizes = [1, 16, 1], strides = [1, 1, 1]} : vector<4x16x1xf32> to vector<1x16x1xf32>
    %69 = vector.shape_cast %68 : vector<1x16x1xf32> to vector<16x1xf32>
    %cst_28 = arith.constant 0.000000e+00 : f32
    %70 = vector.broadcast %cst_28 : f32 to vector<16x1xf32>
    %71 = arith.cmpf ogt, %69, %70 : vector<16x1xf32>
    %72 = vector.extract_strided_slice %35 {offsets = [3, 0, 0], sizes = [1, 16, 32], strides = [1, 1, 1]} : vector<4x16x32xf32> to vector<1x16x32xf32>
    %73 = vector.shape_cast %72 : vector<1x16x32xf32> to vector<16x32xf32>
    %74 = vector.extract_strided_slice %9 {offsets = [0, 96], sizes = [16, 32], strides = [1, 1]} : vector<16x128xf32> to vector<16x32xf32>
    %75 = vector.shape_cast %71 : vector<16x1xi1> to vector<16x1xi1>
    %76 = vector.broadcast %75 : vector<16x1xi1> to vector<16x32xi1>
    %77 = arith.select %76, %73, %74 : vector<16x32xi1>, vector<16x32xf32>
    %78 = tpu.concatenate %47, %57, %67, %77 in 1 : vector<16x32xf32>, vector<16x32xf32>, vector<16x32xf32>, vector<16x32xf32> -> vector<16x128xf32>
    %c0_29 = arith.constant 0 : index
    %c0_30 = arith.constant 0 : index
    %c0_31 = arith.constant 0 : index
    %c0_32 = arith.constant 0 : index
    %79 = vector.load %arg7[%c0_29, %c0_30, %c0_31, %c0_32] : memref<1x1x16x128xf32, #tpu.memory_space<vmem>>, vector<1x1x16x128xf32>
    %80 = vector.shape_cast %79 : vector<1x1x16x128xf32> to vector<16x128xf32>
    %81 = vector.shape_cast %78 : vector<16x128xf32> to vector<1x1x16x128xf32>
    tpu.vector_store %arg7[%c0_29, %c0_30, %c0_31, %c0_32], %81 {strides = array<i32>} : memref<1x1x16x128xf32, #tpu.memory_space<vmem>>, vector<1x1x16x128xf32>,
    return
  }
  func.func @transform_0(%arg0: i32, %arg1: i32) -> (i32, i32, i32, i32) {
    %c0_i32 = arith.constant 0 : i32
    %c0_i32_0 = arith.constant 0 : i32
    %c0_i32_1 = arith.constant 0 : i32
    return %arg0, %arg1, %c0_i32, %c0_i32_0 : i32, i32, i32, i32
  }
  func.func @transform_1(%arg0: i32, %arg1: i32) -> (i32, i32, i32, i32) {
    %c0_i32 = arith.constant 0 : i32
    %c0_i32_0 = arith.constant 0 : i32
    %c0_i32_1 = arith.constant 0 : i32
    return %arg0, %arg1, %c0_i32, %c0_i32_0 : i32, i32, i32, i32
  }
  func.func @transform_2(%arg0: i32, %arg1: i32) -> (i32, i32, i32, i32) {
    %c0_i32 = arith.constant 0 : i32
    %c0_i32_0 = arith.constant 0 : i32
    %c0_i32_1 = arith.constant 0 : i32
    return %arg0, %arg1, %c0_i32, %c0_i32_0 : i32, i32, i32, i32
  }
  func.func @transform_3(%arg0: i32, %arg1: i32) -> (i32, i32, i32, i32) {
    %c0_i32 = arith.constant 0 : i32
    %c0_i32_0 = arith.constant 0 : i32
    %c0_i32_1 = arith.constant 0 : i32
    return %arg0, %arg1, %c0_i32, %c0_i32_0 : i32, i32, i32, i32
  }
  func.func @transform_4(%arg0: i32, %arg1: i32) -> (i32, i32, i32, i32) {
    %c0_i32 = arith.constant 0 : i32
    %c0_i32_0 = arith.constant 0 : i32
    %c0_i32_1 = arith.constant 0 : i32
    return %arg0, %arg1, %c0_i32, %c0_i32_0 : i32, i32, i32, i32
  }
  func.func @transform_5(%arg0: i32, %arg1: i32) -> (i32, i32, i32, i32) {
    %c0_i32 = arith.constant 0 : i32
    %c0_i32_0 = arith.constant 0 : i32
    %c0_i32_1 = arith.constant 0 : i32
    return %arg0, %arg1, %c0_i32, %c0_i32_0 : i32, i32, i32, i32
  }
}

</mosaic_0001>

<llo_original>
// kernel: prob_attention.2
$region0: #{prob_attention.2}
  #allocation0 [shape = 'u32[]', space=smem, size = 0x4, offset = 0x4, fixed_abs, tag = 'smem constant byte address 0x4 - core index']
  #allocation1 [shape = 'u32[144,128]{1,0:T(1,128)}', space=vmem, size = 0x12000, scoped, tag = 'internal scratch']
  #allocation2 [shape = 'f32[4,16]{1,0:T(4,128)}', space=vmem, size = 0x800, scoped, tag = 'scratch operand']
  #allocation3 [shape = 'f32[4,16]{1,0:T(4,128)}', space=vmem, size = 0x800, scoped, tag = 'scratch operand']
  %s0 = inlined_call_operand.vmem [shape: bf16[2,4,16,32], index: 0, kind: input, shape index: {}]
  %s1 = inlined_call_operand.vmem [shape: bf16[2,4,16,32], index: 1, kind: input, shape index: {}]
  %s2 = inlined_call_operand.hbm [shape: f32[16,16], index: 2, kind: input, shape index: {}]
  %s3 = inlined_call_operand.vmem [shape: f32[2,1,4,16], index: 3, kind: output, shape index: {}]
  %s4 = sld [smem:[#allocation0]]
  $region57: #{prob_attention.2} parent=0
    _
  %s6 = ssub.s32 1, %s4
  %s7 = scalar_select 0, %s6, %s4
  $region1: #{prob_attention.2} parent=0
    #allocation4 [shape = 'u8[8192]{0}', space=vmem, size = 0x2000, scoped, tag = 'input window, operand 2, single buffered']
    #allocation5 [shape = 's32[2]{0}', space=sflag, size = 0x8, scoped, tag = 'scoped memory for prob_attention.2']
    %8 = vsyncpa [#allocation5], 0
    loop: start=0, step=1, limit=4
    $region2: #{prob_attention.2} parent=1 // loop_pre_header
      _
    $region3: #{prob_attention.2} parent=1 // loop_header
      %s10 = sphi 0, %s14
      %p11 = scmp.ge.s32.totalorder %s10, 4
      %s17 = sphi 0, %s36
      %s18 = sphi 0, %s32
      %s19 = sphi 0, %s28
      %s20 = sphi 0, %s17
      %s21 = sphi 0, %s18
      %s22 = sphi 0, %s19
      %s23 = sphi 0, %s20
      %s24 = sphi 0, %s21
      %s25 = sphi 0, %s22
      %s41 = sphi 0, %s43
      %s44 = sphi 0, %s41
      %s45 = sphi 0, %s44
      %s61 = sphi 0, %s45
      %s71 = sphi 0, %s73
      %s74 = sphi 0, %s71
      %s75 = sphi 0, %s74
      %s91 = sphi 0, %s75
      %s97 = sphi 0, %s99
      %s100 = sphi 0, %s97
      %s101 = sphi 0, %s100
      %s117 = sphi 0, %s101
      %s125 = sphi 0, %s127
      %s128 = sphi 0, %s125
      %s129 = sphi 0, %s128
      %s145 = sphi 0, %s129
    $region4: #{prob_attention.2} parent=1 // loop_header_branch
      %13 = sbr.rel (%p11) target = $region8
    $region5: #{prob_attention.2} parent=1 // loop_body
      %s15 = ssub.s32 %s10, 1
      %s16 = ssub.s32 %s10, 2
      %s26 = sadd.s32 1, %s19
      %p27 = scmp.ge.s32.totalorder %s26, 1
      %s28 = scalar_select %p27, 0, %s26
      %s29 = sadd.s32 1, %s18
      %s30 = scalar_select %p27, %s29, %s18
      %p31 = scmp.ge.s32.totalorder %s30, 1
      %s32 = scalar_select %p31, 0, %s30
      %s33 = sadd.s32 1, %s17
      %s34 = scalar_select %p31, %s33, %s17
      %p35 = scmp.ge.s32.totalorder %s34, 2
      %s36 = scalar_select %p35, 0, %s34
      %s37 = ssub.s32 %s17, %s36
      %s38 = ssub.s32 %s18, %s32
      %s39 = sor.u32 %s37, %s38
      %p40 = scmp.eq.s32.totalorder %s39, 0
      %s42 = sadd.s32 %s41, 1
      %s43 = scalar_select %p40, %s41, %s42
      %p46 = pneg %p40
      %p47 = scmp.eq.s32.totalorder %s10, 1
      %p48 = por %p46, %p47
      %p49 = scmp.ne.s32.totalorder %s41, %s44
      %p50 = scmp.eq.s32.totalorder %s10, 0
      %p51 = por %p49, %p50
      %p52 = scmp.ne.s32.totalorder %s41, %s44
      %p53 = scmp.eq.s32.totalorder %s15, 1
      %p54 = por %p52, %p53
      %p55 = scmp.ne.s32.totalorder %s44, %s45
      %p56 = scmp.eq.s32.totalorder %s15, 0
      %p57 = por %p55, %p56
      %p58 = scmp.ne.s32.totalorder %s44, %s45
      %p59 = scmp.eq.s32.totalorder %s16, 1
      %p60 = por %p58, %p59
      %p62 = scmp.ne.s32.totalorder %s45, %s61
      %p63 = scmp.eq.s32.totalorder %s16, 0
      %p64 = por %p62, %p63
      %s65 = ssub.s32 %s17, %s36
      %s66 = ssub.s32 %s18, %s32
      %s67 = sor.u32 %s65, %s66
      %s68 = ssub.s32 %s19, %s28
      %s69 = sor.u32 %s67, %s68
      %p70 = scmp.eq.s32.totalorder %s69, 0
      %s72 = sadd.s32 %s71, 1
      %s73 = scalar_select %p70, %s71, %s72
      %p76 = pneg %p70
      %p77 = scmp.eq.s32.totalorder %s10, 1
      %p78 = por %p76, %p77
      %p79 = scmp.ne.s32.totalorder %s71, %s74
      %p80 = scmp.eq.s32.totalorder %s10, 0
      %p81 = por %p79, %p80
      %p82 = scmp.ne.s32.totalorder %s71, %s74
      %p83 = scmp.eq.s32.totalorder %s15, 1
      %p84 = por %p82, %p83
      %p85 = scmp.ne.s32.totalorder %s74, %s75
      %p86 = scmp.eq.s32.totalorder %s15, 0
      %p87 = por %p85, %p86
      %p88 = scmp.ne.s32.totalorder %s74, %s75
      %p89 = scmp.eq.s32.totalorder %s16, 1
      %p90 = por %p88, %p89
      %p92 = scmp.ne.s32.totalorder %s75, %s91
      %p93 = scmp.eq.s32.totalorder %s16, 0
      %p94 = por %p92, %p93
      %s95 = ssub.s32 %s19, %s28
      %p96 = scmp.eq.s32.totalorder %s95, 0
      %s98 = sadd.s32 %s97, 1
      %s99 = scalar_select %p96, %s97, %s98
      %p102 = pneg %p96
      %p103 = scmp.eq.s32.totalorder %s10, 1
      %p104 = por %p102, %p103
      %p105 = scmp.ne.s32.totalorder %s97, %s100
      %p106 = scmp.eq.s32.totalorder %s10, 0
      %p107 = por %p105, %p106
      %p108 = scmp.ne.s32.totalorder %s97, %s100
      %p109 = scmp.eq.s32.totalorder %s15, 1
      %p110 = por %p108, %p109
      %p111 = scmp.ne.s32.totalorder %s100, %s101
      %p112 = scmp.eq.s32.totalorder %s15, 0
      %p113 = por %p111, %p112
      %p114 = scmp.ne.s32.totalorder %s100, %s101
      %p115 = scmp.eq.s32.totalorder %s16, 1
      %p116 = por %p114, %p115
      %p118 = scmp.ne.s32.totalorder %s101, %s117
      %p119 = scmp.eq.s32.totalorder %s16, 0
      %p120 = por %p118, %p119
      %s121 = ssub.s32 %s17, %s36
      %s122 = ssub.s32 %s18, %s32
      %s123 = sor.u32 %s121, %s122
      %p124 = scmp.eq.s32.totalorder %s123, 0
      %s126 = sadd.s32 %s125, 1
      %s127 = scalar_select %p124, %s125, %s126
      %p130 = pneg %p124
      %p131 = scmp.eq.s32.totalorder %s10, 1
      %p132 = por %p130, %p131
      %p133 = scmp.ne.s32.totalorder %s125, %s128
      %p134 = scmp.eq.s32.totalorder %s10, 0
      %p135 = por %p133, %p134
      %p136 = scmp.ne.s32.totalorder %s125, %s128
      %p137 = scmp.eq.s32.totalorder %s15, 1
      %p138 = por %p136, %p137
      %p139 = scmp.ne.s32.totalorder %s128, %s129
      %p140 = scmp.eq.s32.totalorder %s15, 0
      %p141 = por %p139, %p140
      %p142 = scmp.ne.s32.totalorder %s128, %s129
      %p143 = scmp.eq.s32.totalorder %s16, 1
      %p144 = por %p142, %p143
      %p146 = scmp.ne.s32.totalorder %s129, %s145
      %p147 = scmp.eq.s32.totalorder %s16, 0
      %p148 = por %p146, %p147
      %p149 = scmp.le.s32.totalorder 1, %s10
      %p150 = scmp.lt.s32.totalorder %s10, 3
      %p151 = pnand %p149, %p150
      %p152 = pneg %p151
      // Predicated region
      $region9: #{prob_attention.2} parent=5 // pred_check
        _
      $region10: #{prob_attention.2} parent=5 // pred_check_branch
        %154 = sbr.rel (%p151) target = $region12
      $region11: #{prob_attention.2} parent=5 // pred_region
        %s155 = ssub.s32 %s10, 1
        // Predicated region
        $region13: #{prob_attention.2} parent=11 // pred_check
          %p156 = pneg %p113
        $region14: #{prob_attention.2} parent=11 // pred_check_branch
          %158 = sbr.rel (%p156) target = $region16
        $region15: #{prob_attention.2} parent=11 // pred_region
          %s160 = ssub.s32 256, 256
          %161 = vsyncadd [#allocation5], %s160
          %s162 = smul.addr %s22, 128
          %s163 = scalar_lea.hbm %s2, %s162
          %s164 = sshll.u32 [#allocation4], 4
          %s165 = int_to_ptr.vmem [resolvable:$true] %s164
          %170 = dma.hbm_to_vmem [thread:$0]  %s163, 256, %s165, [#allocation5], 128, 128, 8
        $region16: #{prob_attention.2} parent=11 // pred_fallthru
          _
      $region12: #{prob_attention.2} parent=5 // pred_fallthru
        _
      %p171 = scmp.lt.s32.totalorder %s10, 2
      // Predicated region
      $region17: #{prob_attention.2} parent=5 // pred_check
        %p172 = pneg %p171
      $region18: #{prob_attention.2} parent=5 // pred_check_branch
        %174 = sbr.rel (%p172) target = $region20
      $region19: #{prob_attention.2} parent=5 // pred_region
        // Predicated region
        $region21: #{prob_attention.2} parent=19 // pred_check
          %p175 = pneg %p51
        $region22: #{prob_attention.2} parent=19 // pred_check_branch
          %177 = sbr.rel (%p175) target = $region24
        $region23: #{prob_attention.2} parent=19 // pred_region
          %s178 = smul.u32 4, %s18
          %p179 = scmp.lt.s32.totalorder %s17, 1
          %s180 = scalar_select %p179, %s17, 1
          %p181 = scmp.lt.s32.totalorder %s178, 3
          %s182 = scalar_select %p181, %s178, 3
          %s183 = smul.addr %s182, 2
          %s184 = smul.addr %s180, 8
          %s185 = sadd.s32 %s183, %s184
          %s186 = smul.addr %s185, 4
          %s187 = scalar_lea.vmem %s0, %s186
          %s188 = smul.u32 4, %s18
        $region24: #{prob_attention.2} parent=19 // pred_fallthru
          _
        // Predicated region
        $region25: #{prob_attention.2} parent=19 // pred_check
          %p189 = pneg %p81
        $region26: #{prob_attention.2} parent=19 // pred_check_branch
          %191 = sbr.rel (%p189) target = $region28
        $region27: #{prob_attention.2} parent=19 // pred_region
          %s192 = smul.u32 4, %s18
          %s193 = smul.u32 2, %s19
          %p194 = scmp.lt.s32.totalorder %s17, 1
          %s195 = scalar_select %p194, %s17, 1
          %p196 = scmp.lt.s32.totalorder %s192, 3
          %s197 = scalar_select %p196, %s192, 3
          %p198 = scmp.lt.s32.totalorder %s193, 1
          %s199 = scalar_select %p198, %s193, 1
          %s200 = smul.addr %s197, 2
          %s201 = sadd.s32 %s199, %s200
          %s202 = smul.addr %s195, 8
          %s203 = sadd.s32 %s201, %s202
          %s204 = smul.addr %s203, 4
          %s205 = scalar_lea.vmem %s1, %s204
          %s206 = smul.u32 4, %s18
          %s207 = smul.u32 2, %s19
        $region28: #{prob_attention.2} parent=19 // pred_fallthru
          _
      $region20: #{prob_attention.2} parent=5 // pred_fallthru
        _
      %p208 = scmp.le.s32.totalorder 1, %s10
      %p209 = scmp.lt.s32.totalorder %s10, 3
      %p210 = pnand %p208, %p209
      %p211 = pneg %p210
      // Predicated region
      $region29: #{prob_attention.2} parent=5 // pred_check
        _
      $region30: #{prob_attention.2} parent=5 // pred_check_branch
        %213 = sbr.rel (%p210) target = $region32
      $region31: #{prob_attention.2} parent=5 // pred_region
        %s214 = ssub.s32 %s10, 1
        // Predicated region
        $region33: #{prob_attention.2} parent=31 // pred_check
          %p215 = pneg %p113
        $region34: #{prob_attention.2} parent=31 // pred_check_branch
          %217 = sbr.rel (%p215) target = $region36
        $region35: #{prob_attention.2} parent=31 // pred_region
          %218 = dma.done [#allocation5], 256
        $region36: #{prob_attention.2} parent=31 // pred_fallthru
          _
        %s219 = smul.u32 4, %s21
        %p220 = scmp.lt.s32.totalorder %s20, 1
        %s221 = scalar_select %p220, %s20, 1
        %p222 = scmp.lt.s32.totalorder %s219, 3
        %s223 = scalar_select %p222, %s219, 3
        %s224 = smul.addr %s223, 2
        %s225 = smul.addr %s221, 8
        %s226 = sadd.s32 %s224, %s225
        %s227 = smul.addr %s226, 4
        %s228 = scalar_lea.vmem %s0, %s227
        %p229 = pneg %p57
        %p230 = pneg %p54
        %s231 = smul.u32 4, %s21
        %s232 = smul.u32 2, %s22
        %p233 = scmp.lt.s32.totalorder %s20, 1
        %s234 = scalar_select %p233, %s20, 1
        %p235 = scmp.lt.s32.totalorder %s231, 3
        %s236 = scalar_select %p235, %s231, 3
        %p237 = scmp.lt.s32.totalorder %s232, 1
        %s238 = scalar_select %p237, %s232, 1
        %s239 = smul.addr %s236, 2
        %s240 = sadd.s32 %s238, %s239
        %s241 = smul.addr %s234, 8
        %s242 = sadd.s32 %s240, %s241
        %s243 = smul.addr %s242, 4
        %s244 = scalar_lea.vmem %s1, %s243
        %p245 = pneg %p87
        %p246 = pneg %p84
        %p247 = pneg %p113
        %p248 = pneg %p110
        %p249 = pneg %p141
        %p250 = pneg %p138
        %p251 = scmp.lt.s32.totalorder %s20, 1
        %s252 = scalar_select %p251, %s20, 1
        %p253 = scmp.lt.s32.totalorder %s21, 0
        %s254 = scalar_select %p253, %s21, 0
        %s255 = sadd.s32 %s254, %s252
        %s256 = smul.addr %s255, 4
        %s257 = scalar_lea.vmem %s3, %s256
        %s258 = smul.u32 4, %s21
        %p259 = scmp.lt.s32.totalorder %s20, 1
        %s260 = scalar_select %p259, %s20, 1
        %p261 = scmp.lt.s32.totalorder %s258, 3
        %s262 = scalar_select %p261, %s258, 3
        %s263 = smul.addr %s262, 2
        %s264 = smul.addr %s260, 8
        %s265 = sadd.s32 %s263, %s264
        %s266 = smul.addr %s265, 4
        %s267 = scalar_lea.vmem %s0, %s266
        %s268 = smul.u32 4, %s21
        %s269 = smul.u32 4, %s21
        %s270 = smul.u32 2, %s22
        %p271 = scmp.lt.s32.totalorder %s20, 1
        %s272 = scalar_select %p271, %s20, 1
        %p273 = scmp.lt.s32.totalorder %s269, 3
        %s274 = scalar_select %p273, %s269, 3
        %p275 = scmp.lt.s32.totalorder %s270, 1
        %s276 = scalar_select %p275, %s270, 1
        %s277 = smul.addr %s274, 2
        %s278 = sadd.s32 %s276, %s277
        %s279 = smul.addr %s272, 8
        %s280 = sadd.s32 %s278, %s279
        %s281 = smul.addr %s280, 4
        %s282 = scalar_lea.vmem %s1, %s281
        %s283 = smul.u32 4, %s21
        %s284 = smul.u32 2, %s22
        %p285 = scmp.lt.s32.totalorder %s20, 1
        %s286 = scalar_select %p285, %s20, 1
        %p287 = scmp.lt.s32.totalorder %s21, 0
        %s288 = scalar_select %p287, %s21, 0
        %s289 = sadd.s32 %s288, %s286
        %s290 = smul.addr %s289, 4
        %s291 = scalar_lea.vmem %s3, %s290
        %p293 = scmp.eq.s32.totalorder %s22, 0
        // Predicated region
        $region37: #{prob_attention.2} parent=31 // pred_check
          %p294 = pneg %p293
        $region38: #{prob_attention.2} parent=31 // pred_check_branch
          %296 = sbr.rel (%p294) target = $region40
        $region39: #{prob_attention.2} parent=31 // pred_region
          %vm297 = vcmask 125952
          %298 = vst.msk [vmem:[#allocation2] sm:$0xf] %vm297, -1e+30
          %299 = vst.msk [vmem:[#allocation3] sm:$0xf] %vm297, 0.0
        $region40: #{prob_attention.2} parent=31 // pred_fallthru
          _
        %v300 = vld [vmem:[%s267] sm:$0xf]
        %v301 = vld [vmem:[%s267 + $0x4] sm:$0xf]
        %v302 = vld [vmem:[%s267 + $0x8] sm:$0xf]
        %v303 = vld [vmem:[%s267 + $0xc] sm:$0xf]
        %v304 = vld [vmem:[%s267 + $0x10] sm:$0xf]
        %v305 = vld [vmem:[%s267 + $0x14] sm:$0xf]
        %v306 = vld [vmem:[%s267 + $0x18] sm:$0xf]
        %v307 = vld [vmem:[%s267 + $0x1c] sm:$0xf]
        %v308 = vld [vmem:[%s282] sm:$0xf]
        %v309 = vld [vmem:[%s282 + $0x4] sm:$0xf]
        %v310 = vld [vmem:[%s282 + $0x8] sm:$0xf]
        %v311 = vld [vmem:[%s282 + $0xc] sm:$0xf]
        %v312 = vld [vmem:[%s282 + $0x10] sm:$0xf]
        %v313 = vld [vmem:[%s282 + $0x14] sm:$0xf]
        %v314 = vld [vmem:[%s282 + $0x18] sm:$0xf]
        %v315 = vld [vmem:[%s282 + $0x1c] sm:$0xf]
        %v316 = vld [vmem:[#allocation4] sm:$0xff]
        %v317 = vld [vmem:[#allocation4 + $0x8] sm:$0xff]
        %v320 = vunpack.c.l.b16 %v300
        %v321 = vunpack.c.l.b16 %v301
        %v322 = vpack.c.b16 %v321, %v320
        %v325 = vunpack.c.l.b16 %v308
        %v326 = vunpack.c.l.b16 %v309
        %v327 = vpack.c.b16 %v326, %v325
        %vm328 = vcmask 261120
        %v330 = vsel %vm328, %v322, 0
        %v333 = vsel %vm328, %v327, 0
        %335 = vmatprep.subr.bf16.mxu0 0
        %336 = vmatpush1.bf16.xpose.msra.mxu0 0
        %337 = vmatprep.subr.bf16.mxu0 0
        %338 = vmatpush1.bf16.xpose.msra.mxu0 0
        %339 = vmatprep.subr.bf16.mxu0 0
        %340 = vmatpush1.bf16.xpose.msra.mxu0 0
        %341 = vmatprep.subr.bf16.mxu0 0
        %342 = vmatpush1.bf16.xpose.msra.mxu0 0
        %343 = vmatprep.subr.bf16.mxu0 0
        %344 = vmatpush1.bf16.xpose.msra.mxu0 0
        %345 = vmatprep.subr.bf16.mxu0 0
        %346 = vmatpush1.bf16.xpose.msra.mxu0 0
        %347 = vmatprep.subr.bf16.mxu0 0
        %348 = vmatpush1.bf16.xpose.msra.mxu0 0
        %349 = vmatprep.subr.bf16.mxu0 0
        %350 = vmatpush1.bf16.xpose.msra.mxu0 %v333
        %351 = vmatprep.subr.bf16.mxu0 0
        %352 = vmatpush2.bf16.xpose.msra.mxu0 0
        %353 = vmatprep.subr.bf16.mxu0 0
        %354 = vmatpush2.bf16.xpose.msra.mxu0 0
        %355 = vmatprep.subr.bf16.mxu0 0
        %356 = vmatpush2.bf16.xpose.msra.mxu0 0
        %357 = vmatprep.subr.bf16.mxu0 0
        %358 = vmatpush2.bf16.xpose.msra.mxu0 0
        %359 = vmatprep.subr.bf16.mxu0 0
        %360 = vmatpush2.bf16.xpose.msra.mxu0 0
        %361 = vmatprep.subr.bf16.mxu0 0
        %362 = vmatpush2.bf16.xpose.msra.mxu0 0
        %363 = vmatprep.subr.bf16.mxu0 0
        %364 = vmatpush2.bf16.xpose.msra.mxu0 0
        %365 = vmatprep.subr.bf16.mxu0 0
        %366 = vmatpush2.bf16.xpose.msra.mxu0 0
        %367 = vmatprep.mubr.bf16.mxu0 0
        %368 = vmatmul.mubr.bf16.gmra.mxu0 %v330
        %v369 = vpop.f32.mrf.mxu0
        %v370 = vadd.f32 0.0, %v369
        %v371 = vpop.f32.mrf.mxu0
        %v372 = vpop.f32.mrf.mxu0
        %v373 = vadd.f32 0.0, %v372
        %v374 = vpop.f32.mrf.mxu0
        %375 = vdwg.mxu0
        %v378 = vunpack.c.l.b16 %v302
        %v379 = vunpack.c.l.b16 %v303
        %v380 = vpack.c.b16 %v379, %v378
        %v383 = vunpack.c.l.b16 %v310
        %v384 = vunpack.c.l.b16 %v311
        %v385 = vpack.c.b16 %v384, %v383
        %v387 = vsel %vm328, %v380, 0
        %v390 = vsel %vm328, %v385, 0
        %392 = vmatprep.subr.bf16.mxu0 0
        %393 = vmatpush1.bf16.xpose.msra.mxu0 0
        %394 = vmatprep.subr.bf16.mxu0 0
        %395 = vmatpush1.bf16.xpose.msra.mxu0 0
        %396 = vmatprep.subr.bf16.mxu0 0
        %397 = vmatpush1.bf16.xpose.msra.mxu0 0
        %398 = vmatprep.subr.bf16.mxu0 0
        %399 = vmatpush1.bf16.xpose.msra.mxu0 0
        %400 = vmatprep.subr.bf16.mxu0 0
        %401 = vmatpush1.bf16.xpose.msra.mxu0 0
        %402 = vmatprep.subr.bf16.mxu0 0
        %403 = vmatpush1.bf16.xpose.msra.mxu0 0
        %404 = vmatprep.subr.bf16.mxu0 0
        %405 = vmatpush1.bf16.xpose.msra.mxu0 0
        %406 = vmatprep.subr.bf16.mxu0 0
        %407 = vmatpush1.bf16.xpose.msra.mxu0 %v390
        %408 = vmatprep.subr.bf16.mxu0 0
        %409 = vmatpush2.bf16.xpose.msra.mxu0 0
        %410 = vmatprep.subr.bf16.mxu0 0
        %411 = vmatpush2.bf16.xpose.msra.mxu0 0
        %412 = vmatprep.subr.bf16.mxu0 0
        %413 = vmatpush2.bf16.xpose.msra.mxu0 0
        %414 = vmatprep.subr.bf16.mxu0 0
        %415 = vmatpush2.bf16.xpose.msra.mxu0 0
        %416 = vmatprep.subr.bf16.mxu0 0
        %417 = vmatpush2.bf16.xpose.msra.mxu0 0
        %418 = vmatprep.subr.bf16.mxu0 0
        %419 = vmatpush2.bf16.xpose.msra.mxu0 0
        %420 = vmatprep.subr.bf16.mxu0 0
        %421 = vmatpush2.bf16.xpose.msra.mxu0 0
        %422 = vmatprep.subr.bf16.mxu0 0
        %423 = vmatpush2.bf16.xpose.msra.mxu0 0
        %424 = vmatprep.mubr.bf16.mxu0 0
        %425 = vmatmul.mubr.bf16.gmra.mxu0 %v387
        %v426 = vpop.f32.mrf.mxu0
        %v427 = vadd.f32 0.0, %v426
        %v428 = vpop.f32.mrf.mxu0
        %v429 = vpop.f32.mrf.mxu0
        %v430 = vadd.f32 0.0, %v429
        %v431 = vpop.f32.mrf.mxu0
        %432 = vdwg.mxu0
        %v435 = vunpack.c.l.b16 %v304
        %v436 = vunpack.c.l.b16 %v305
        %v437 = vpack.c.b16 %v436, %v435
        %v440 = vunpack.c.l.b16 %v312
        %v441 = vunpack.c.l.b16 %v313
        %v442 = vpack.c.b16 %v441, %v440
        %v444 = vsel %vm328, %v437, 0
        %v447 = vsel %vm328, %v442, 0
        %449 = vmatprep.subr.bf16.mxu0 0
        %450 = vmatpush1.bf16.xpose.msra.mxu0 0
        %451 = vmatprep.subr.bf16.mxu0 0
        %452 = vmatpush1.bf16.xpose.msra.mxu0 0
        %453 = vmatprep.subr.bf16.mxu0 0
        %454 = vmatpush1.bf16.xpose.msra.mxu0 0
        %455 = vmatprep.subr.bf16.mxu0 0
        %456 = vmatpush1.bf16.xpose.msra.mxu0 0
        %457 = vmatprep.subr.bf16.mxu0 0
        %458 = vmatpush1.bf16.xpose.msra.mxu0 0
        %459 = vmatprep.subr.bf16.mxu0 0
        %460 = vmatpush1.bf16.xpose.msra.mxu0 0
        %461 = vmatprep.subr.bf16.mxu0 0
        %462 = vmatpush1.bf16.xpose.msra.mxu0 0
        %463 = vmatprep.subr.bf16.mxu0 0
        %464 = vmatpush1.bf16.xpose.msra.mxu0 %v447
        %465 = vmatprep.subr.bf16.mxu0 0
        %466 = vmatpush2.bf16.xpose.msra.mxu0 0
        %467 = vmatprep.subr.bf16.mxu0 0
        %468 = vmatpush2.bf16.xpose.msra.mxu0 0
        %469 = vmatprep.subr.bf16.mxu0 0
        %470 = vmatpush2.bf16.xpose.msra.mxu0 0
        %471 = vmatprep.subr.bf16.mxu0 0
        %472 = vmatpush2.bf16.xpose.msra.mxu0 0
        %473 = vmatprep.subr.bf16.mxu0 0
        %474 = vmatpush2.bf16.xpose.msra.mxu0 0
        %475 = vmatprep.subr.bf16.mxu0 0
        %476 = vmatpush2.bf16.xpose.msra.mxu0 0
        %477 = vmatprep.subr.bf16.mxu0 0
        %478 = vmatpush2.bf16.xpose.msra.mxu0 0
        %479 = vmatprep.subr.bf16.mxu0 0
        %480 = vmatpush2.bf16.xpose.msra.mxu0 0
        %481 = vmatprep.mubr.bf16.mxu0 0
        %482 = vmatmul.mubr.bf16.gmra.mxu0 %v444
        %v483 = vpop.f32.mrf.mxu0
        %v484 = vadd.f32 0.0, %v483
        %v485 = vpop.f32.mrf.mxu0
        %v486 = vpop.f32.mrf.mxu0
        %v487 = vadd.f32 0.0, %v486
        %v488 = vpop.f32.mrf.mxu0
        %489 = vdwg.mxu0
        %v492 = vunpack.c.l.b16 %v306
        %v493 = vunpack.c.l.b16 %v307
        %v494 = vpack.c.b16 %v493, %v492
        %v497 = vunpack.c.l.b16 %v314
        %v498 = vunpack.c.l.b16 %v315
        %v499 = vpack.c.b16 %v498, %v497
        %v501 = vsel %vm328, %v494, 0
        %v504 = vsel %vm328, %v499, 0
        %506 = vmatprep.subr.bf16.mxu0 0
        %507 = vmatpush1.bf16.xpose.msra.mxu0 0
        %508 = vmatprep.subr.bf16.mxu0 0
        %509 = vmatpush1.bf16.xpose.msra.mxu0 0
        %510 = vmatprep.subr.bf16.mxu0 0
        %511 = vmatpush1.bf16.xpose.msra.mxu0 0
        %512 = vmatprep.subr.bf16.mxu0 0
        %513 = vmatpush1.bf16.xpose.msra.mxu0 0
        %514 = vmatprep.subr.bf16.mxu0 0
        %515 = vmatpush1.bf16.xpose.msra.mxu0 0
        %516 = vmatprep.subr.bf16.mxu0 0
        %517 = vmatpush1.bf16.xpose.msra.mxu0 0
        %518 = vmatprep.subr.bf16.mxu0 0
        %519 = vmatpush1.bf16.xpose.msra.mxu0 0
        %520 = vmatprep.subr.bf16.mxu0 0
        %521 = vmatpush1.bf16.xpose.msra.mxu0 %v504
        %522 = vmatprep.subr.bf16.mxu0 0
        %523 = vmatpush2.bf16.xpose.msra.mxu0 0
        %524 = vmatprep.subr.bf16.mxu0 0
        %525 = vmatpush2.bf16.xpose.msra.mxu0 0
        %526 = vmatprep.subr.bf16.mxu0 0
        %527 = vmatpush2.bf16.xpose.msra.mxu0 0
        %528 = vmatprep.subr.bf16.mxu0 0
        %529 = vmatpush2.bf16.xpose.msra.mxu0 0
        %530 = vmatprep.subr.bf16.mxu0 0
        %531 = vmatpush2.bf16.xpose.msra.mxu0 0
        %532 = vmatprep.subr.bf16.mxu0 0
        %533 = vmatpush2.bf16.xpose.msra.mxu0 0
        %534 = vmatprep.subr.bf16.mxu0 0
        %535 = vmatpush2.bf16.xpose.msra.mxu0 0
        %536 = vmatprep.subr.bf16.mxu0 0
        %537 = vmatpush2.bf16.xpose.msra.mxu0 0
        %538 = vmatprep.mubr.bf16.mxu0 0
        %539 = vmatmul.mubr.bf16.gmra.mxu0 %v501
        %v540 = vpop.f32.mrf.mxu0
        %v541 = vadd.f32 0.0, %v540
        %v542 = vpop.f32.mrf.mxu0
        %v543 = vpop.f32.mrf.mxu0
        %v544 = vadd.f32 0.0, %v543
        %v545 = vpop.f32.mrf.mxu0
        %546 = vdwg.mxu0
        %vm547 = vcmp.gt.f32.partialorder %v316, 0.0
        %vm548 = vcmp.gt.f32.partialorder %v317, 0.0
        %v549 = vsel %vm547, 0.0, -1e+30
        %v550 = vsel %vm548, 0.0, -1e+30
        %v551 = vld [vmem:[#allocation2] sm:$0xf]
        %v552 = vadd.f32 %v370, %v549
        %v553 = vadd.f32 %v373, %v550
        %v554 = vadd.f32 %v427, %v549
        %v555 = vadd.f32 %v430, %v550
        %v556 = vadd.f32 %v484, %v549
        %v557 = vadd.f32 %v487, %v550
        %v558 = vadd.f32 %v541, %v549
        %v559 = vadd.f32 %v544, %v550
        %vm560 = vcmask 130048
        %v561 = vsel %vm560, %v552, -inf
        %562 = vmax.xlane.f32.xlu0 %v561
        %v563 = vpop.xlane.xlu0 %562
        %v564 = vsel %vm560, %v553, -inf
        %565 = vmax.xlane.f32.xlu0 %v564
        %v566 = vpop.xlane.xlu0 %565
        %v567 = vsel %vm560, %v554, -inf
        %568 = vmax.xlane.f32.xlu0 %v567
        %v569 = vpop.xlane.xlu0 %568
        %v570 = vsel %vm560, %v555, -inf
        %571 = vmax.xlane.f32.xlu0 %v570
        %v572 = vpop.xlane.xlu0 %571
        %v573 = vsel %vm560, %v556, -inf
        %574 = vmax.xlane.f32.xlu0 %v573
        %v575 = vpop.xlane.xlu0 %574
        %v576 = vsel %vm560, %v557, -inf
        %577 = vmax.xlane.f32.xlu0 %v576
        %v578 = vpop.xlane.xlu0 %577
        %v579 = vsel %vm560, %v558, -inf
        %580 = vmax.xlane.f32.xlu0 %v579
        %v581 = vpop.xlane.xlu0 %580
        %v582 = vsel %vm560, %v559, -inf
        %583 = vmax.xlane.f32.xlu0 %v582
        %v584 = vpop.xlane.xlu0 %583
        %v593 = vlaneseq
        %v594 = vand.u32 %v593, 127
        %v595 = vlaneseq
        %v596 = vshrl.u32 %v595, 7
        %v597 = vsub.s32 %v594, %v596
        %v598 = vrot.slane %v563, %v597
        %v599 = vadd.s32 %v594, 4294967288
        %v600 = vlaneseq
        %v601 = vshrl.u32 %v600, 7
        %v602 = vsub.s32 %v599, %v601
        %v603 = vrot.slane %v566, %v602
        %vm604 = vcmask 130112
        %v605 = vsel %vm604, %v603, %v598
        %v606 = vlaneseq
        %v607 = vshrl.u32 %v606, 7
        %v608 = vsub.s32 %v594, %v607
        %v609 = vrot.slane %v569, %v608
        %v610 = vlaneseq
        %v611 = vshrl.u32 %v610, 7
        %v612 = vsub.s32 %v599, %v611
        %v613 = vrot.slane %v572, %v612
        %v614 = vsel %vm604, %v613, %v609
        %v615 = vlaneseq
        %v616 = vshrl.u32 %v615, 7
        %v617 = vsub.s32 %v594, %v616
        %v618 = vrot.slane %v575, %v617
        %v619 = vlaneseq
        %v620 = vshrl.u32 %v619, 7
        %v621 = vsub.s32 %v599, %v620
        %v622 = vrot.slane %v578, %v621
        %v623 = vsel %vm604, %v622, %v618
        %v624 = vlaneseq
        %v625 = vshrl.u32 %v624, 7
        %v626 = vsub.s32 %v594, %v625
        %v627 = vrot.slane %v581, %v626
        %v628 = vlaneseq
        %v629 = vshrl.u32 %v628, 7
        %v630 = vsub.s32 %v599, %v629
        %v631 = vrot.slane %v584, %v630
        %v632 = vsel %vm604, %v631, %v627
        %vm633 = vcmask 1041409
        %v634 = vsel %vm633, %v614, %v605
        %vm635 = vcmask 1042434
        %v636 = vsel %vm635, %v623, %v634
        %vm637 = vcmask 1043459
        %v638 = vsel %vm637, %v632, %v636
        %v640 = vmax.f32 %v551, %v638
        %vm641 = vcmask 125952
        %642 = vst.msk [vmem:[#allocation2] sm:$0xf] %vm641, %v640
        %v643 = vld [vmem:[#allocation3] sm:$0xf]
        %v644 = vmul.f32 %v370, %v316
        %v645 = vmul.f32 %v373, %v317
        %v646 = vmul.f32 %v427, %v316
        %v647 = vmul.f32 %v430, %v317
        %v648 = vmul.f32 %v484, %v316
        %v649 = vmul.f32 %v487, %v317
        %v650 = vmul.f32 %v541, %v316
        %v651 = vmul.f32 %v544, %v317
        %v652 = vsel %vm560, %v644, 0.0
        %653 = vadd.xlane.f32.xlu0 %v652
        %v654 = vpop.xlane.xlu0 %653
        %v655 = vsel %vm560, %v645, 0.0
        %656 = vadd.xlane.f32.xlu0 %v655
        %v657 = vpop.xlane.xlu0 %656
        %v658 = vsel %vm560, %v646, 0.0
        %659 = vadd.xlane.f32.xlu0 %v658
        %v660 = vpop.xlane.xlu0 %659
        %v661 = vsel %vm560, %v647, 0.0
        %662 = vadd.xlane.f32.xlu0 %v661
        %v663 = vpop.xlane.xlu0 %662
        %v664 = vsel %vm560, %v648, 0.0
        %665 = vadd.xlane.f32.xlu0 %v664
        %v666 = vpop.xlane.xlu0 %665
        %v667 = vsel %vm560, %v649, 0.0
        %668 = vadd.xlane.f32.xlu0 %v667
        %v669 = vpop.xlane.xlu0 %668
        %v670 = vsel %vm560, %v650, 0.0
        %671 = vadd.xlane.f32.xlu0 %v670
        %v672 = vpop.xlane.xlu0 %671
        %v673 = vsel %vm560, %v651, 0.0
        %674 = vadd.xlane.f32.xlu0 %v673
        %v675 = vpop.xlane.xlu0 %674
        %v684 = vlaneseq
        %v685 = vshrl.u32 %v684, 7
        %v686 = vsub.s32 %v594, %v685
        %v687 = vrot.slane %v654, %v686
        %v688 = vlaneseq
        %v689 = vshrl.u32 %v688, 7
        %v690 = vsub.s32 %v599, %v689
        %v691 = vrot.slane %v657, %v690
        %v692 = vsel %vm604, %v691, %v687
        %v693 = vlaneseq
        %v694 = vshrl.u32 %v693, 7
        %v695 = vsub.s32 %v594, %v694
        %v696 = vrot.slane %v660, %v695
        %v697 = vlaneseq
        %v698 = vshrl.u32 %v697, 7
        %v699 = vsub.s32 %v599, %v698
        %v700 = vrot.slane %v663, %v699
        %v701 = vsel %vm604, %v700, %v696
        %v702 = vlaneseq
        %v703 = vshrl.u32 %v702, 7
        %v704 = vsub.s32 %v594, %v703
        %v705 = vrot.slane %v666, %v704
        %v706 = vlaneseq
        %v707 = vshrl.u32 %v706, 7
        %v708 = vsub.s32 %v599, %v707
        %v709 = vrot.slane %v669, %v708
        %v710 = vsel %vm604, %v709, %v705
        %v711 = vlaneseq
        %v712 = vshrl.u32 %v711, 7
        %v713 = vsub.s32 %v594, %v712
        %v714 = vrot.slane %v672, %v713
        %v715 = vlaneseq
        %v716 = vshrl.u32 %v715, 7
        %v717 = vsub.s32 %v599, %v716
        %v718 = vrot.slane %v675, %v717
        %v719 = vsel %vm604, %v718, %v714
        %v720 = vsel %vm633, %v701, %v692
        %v721 = vsel %vm635, %v710, %v720
        %v722 = vsel %vm637, %v719, %v721
        %v724 = vadd.f32 %v643, %v722
        %725 = vst.msk [vmem:[#allocation3] sm:$0xf] %vm641, %v724
        // Predicated region
        $region41: #{prob_attention.2} parent=31 // pred_check
          %p726 = pneg %p293
        $region42: #{prob_attention.2} parent=31 // pred_check_branch
          %728 = sbr.rel (%p726) target = $region44
        $region43: #{prob_attention.2} parent=31 // pred_region
          %v729 = vld [vmem:[#allocation2] sm:$0xf]
          %v730 = vld [vmem:[#allocation3] sm:$0xf]
          %v731 = vmul.f32 %v730, 0.0625
          %v732 = vsub.f32 %v729, %v731
          %733 = vst.msk [vmem:[%s291] sm:$0xf] %vm641, %v732
        $region44: #{prob_attention.2} parent=31 // pred_fallthru
          _
        %p734 = scmp.lt.s32.totalorder %s20, 1
        %s735 = scalar_select %p734, %s20, 1
        %p736 = scmp.lt.s32.totalorder %s21, 0
        %s737 = scalar_select %p736, %s21, 0
        %s738 = sadd.s32 %s737, %s735
        %s739 = smul.addr %s738, 4
        %s740 = scalar_lea.vmem %s3, %s739
        // Predicated region
        $region45: #{prob_attention.2} parent=31 // pred_check
          %p741 = pneg %p138
        $region46: #{prob_attention.2} parent=31 // pred_check_branch
          %743 = sbr.rel (%p741) target = $region48
        $region47: #{prob_attention.2} parent=31 // pred_region
          _
        $region48: #{prob_attention.2} parent=31 // pred_fallthru
          _
      $region32: #{prob_attention.2} parent=5 // pred_fallthru
        _
      %p744 = scmp.le.s32.totalorder 2, %s10
      // Predicated region
      $region49: #{prob_attention.2} parent=5 // pred_check
        %p745 = pneg %p744
      $region50: #{prob_attention.2} parent=5 // pred_check_branch
        %747 = sbr.rel (%p745) target = $region52
      $region51: #{prob_attention.2} parent=5 // pred_region
        %s748 = ssub.s32 %s10, 2
        // Predicated region
        $region53: #{prob_attention.2} parent=51 // pred_check
          %p749 = pneg %p144
        $region54: #{prob_attention.2} parent=51 // pred_check_branch
          %751 = sbr.rel (%p749) target = $region56
        $region55: #{prob_attention.2} parent=51 // pred_region
          %p752 = scmp.lt.s32.totalorder %s23, 1
          %s753 = scalar_select %p752, %s23, 1
          %p754 = scmp.lt.s32.totalorder %s24, 0
          %s755 = scalar_select %p754, %s24, 0
          %s756 = sadd.s32 %s755, %s753
          %s757 = smul.addr %s756, 4
          %s758 = scalar_lea.vmem %s3, %s757
        $region56: #{prob_attention.2} parent=51 // pred_fallthru
          _
      $region52: #{prob_attention.2} parent=5 // pred_fallthru
        _
    $region6: #{prob_attention.2} parent=1 // loop_footer
      %s14 = sadd.s32 1, %s10
    $region7: #{prob_attention.2} parent=1 // loop_footer_branch
      %9 = sbr.rel target = $region3
    $region8: #{prob_attention.2} parent=1 // loop_exit
      _
    %759 = vsyncpa [#allocation5], 1
    %s760 = scalar_lea.sflag [#allocation5], 1
    %761 = vsyncpa %s760, 1

// kernel: prob_attention.3
$region0: #{prob_attention.3}
  #allocation0 [shape = 'u32[]', space=smem, size = 0x4, offset = 0x4, fixed_abs, tag = 'smem constant byte address 0x4 - core index']
  #allocation1 [shape = 'u32[144,128]{1,0:T(1,128)}', space=vmem, size = 0x12000, scoped, tag = 'internal scratch']
  %s0 = inlined_call_operand.vmem [shape: bf16[2,4,15,32], index: 0, kind: input, shape index: {}]
  %s1 = inlined_call_operand.vmem [shape: bf16[2,4,16,32], index: 1, kind: input, shape index: {}]
  %s2 = inlined_call_operand.vmem [shape: bf16[2,4,16,32], index: 2, kind: input, shape index: {}]
  %s3 = inlined_call_operand.vmem [shape: s32[2,1,4,15], index: 3, kind: input, shape index: {}]
  %s4 = inlined_call_operand.vmem [shape: f32[2,1,16,128], index: 4, kind: input, shape index: {}, may-alias: {4,5}]
  %s5 = inlined_call_operand.vmem [shape: f32[2,1,16,128], index: 5, kind: output, shape index: {}, may-alias: {4,5}]
  %s6 = sld [smem:[#allocation0]]
  $region53: #{prob_attention.3} parent=0
    _
  %s8 = ssub.s32 1, %s6
  %s9 = scalar_select 0, %s8, %s6
  loop: start=0, step=1, limit=4
  $region2: #{prob_attention.3} parent=0 // loop_pre_header
    _
  $region3: #{prob_attention.3} parent=0 // loop_header
    %s11 = sphi 0, %s15
    %p12 = scmp.ge.s32.totalorder %s11, 4
    %s18 = sphi 0, %s30
    %s19 = sphi 0, %s26
    %s20 = sphi 0, %s18
    %s21 = sphi 0, %s19
    %s22 = sphi 0, %s20
    %s23 = sphi 0, %s21
    %s35 = sphi 0, %s37
    %s38 = sphi 0, %s35
    %s39 = sphi 0, %s38
    %s55 = sphi 0, %s39
    %s63 = sphi 0, %s65
    %s66 = sphi 0, %s63
    %s67 = sphi 0, %s66
    %s83 = sphi 0, %s67
    %s91 = sphi 0, %s93
    %s94 = sphi 0, %s91
    %s95 = sphi 0, %s94
    %s111 = sphi 0, %s95
    %s119 = sphi 0, %s121
    %s122 = sphi 0, %s119
    %s123 = sphi 0, %s122
    %s139 = sphi 0, %s123
    %s147 = sphi 0, %s149
    %s150 = sphi 0, %s147
    %s151 = sphi 0, %s150
    %s167 = sphi 0, %s151
    %s175 = sphi 0, %s177
    %s178 = sphi 0, %s175
    %s179 = sphi 0, %s178
    %s195 = sphi 0, %s179
  $region4: #{prob_attention.3} parent=0 // loop_header_branch
    %14 = sbr.rel (%p12) target = $region8
  $region5: #{prob_attention.3} parent=0 // loop_body
    %s16 = ssub.s32 %s11, 1
    %s17 = ssub.s32 %s11, 2
    %s24 = sadd.s32 1, %s19
    %p25 = scmp.ge.s32.totalorder %s24, 1
    %s26 = scalar_select %p25, 0, %s24
    %s27 = sadd.s32 1, %s18
    %s28 = scalar_select %p25, %s27, %s18
    %p29 = scmp.ge.s32.totalorder %s28, 2
    %s30 = scalar_select %p29, 0, %s28
    %s31 = ssub.s32 %s18, %s30
    %s32 = ssub.s32 %s19, %s26
    %s33 = sor.u32 %s31, %s32
    %p34 = scmp.eq.s32.totalorder %s33, 0
    %s36 = sadd.s32 %s35, 1
    %s37 = scalar_select %p34, %s35, %s36
    %p40 = pneg %p34
    %p41 = scmp.eq.s32.totalorder %s11, 1
    %p42 = por %p40, %p41
    %p43 = scmp.ne.s32.totalorder %s35, %s38
    %p44 = scmp.eq.s32.totalorder %s11, 0
    %p45 = por %p43, %p44
    %p46 = scmp.ne.s32.totalorder %s35, %s38
    %p47 = scmp.eq.s32.totalorder %s16, 1
    %p48 = por %p46, %p47
    %p49 = scmp.ne.s32.totalorder %s38, %s39
    %p50 = scmp.eq.s32.totalorder %s16, 0
    %p51 = por %p49, %p50
    %p52 = scmp.ne.s32.totalorder %s38, %s39
    %p53 = scmp.eq.s32.totalorder %s17, 1
    %p54 = por %p52, %p53
    %p56 = scmp.ne.s32.totalorder %s39, %s55
    %p57 = scmp.eq.s32.totalorder %s17, 0
    %p58 = por %p56, %p57
    %s59 = ssub.s32 %s18, %s30
    %s60 = ssub.s32 %s19, %s26
    %s61 = sor.u32 %s59, %s60
    %p62 = scmp.eq.s32.totalorder %s61, 0
    %s64 = sadd.s32 %s63, 1
    %s65 = scalar_select %p62, %s63, %s64
    %p68 = pneg %p62
    %p69 = scmp.eq.s32.totalorder %s11, 1
    %p70 = por %p68, %p69
    %p71 = scmp.ne.s32.totalorder %s63, %s66
    %p72 = scmp.eq.s32.totalorder %s11, 0
    %p73 = por %p71, %p72
    %p74 = scmp.ne.s32.totalorder %s63, %s66
    %p75 = scmp.eq.s32.totalorder %s16, 1
    %p76 = por %p74, %p75
    %p77 = scmp.ne.s32.totalorder %s66, %s67
    %p78 = scmp.eq.s32.totalorder %s16, 0
    %p79 = por %p77, %p78
    %p80 = scmp.ne.s32.totalorder %s66, %s67
    %p81 = scmp.eq.s32.totalorder %s17, 1
    %p82 = por %p80, %p81
    %p84 = scmp.ne.s32.totalorder %s67, %s83
    %p85 = scmp.eq.s32.totalorder %s17, 0
    %p86 = por %p84, %p85
    %s87 = ssub.s32 %s18, %s30
    %s88 = ssub.s32 %s19, %s26
    %s89 = sor.u32 %s87, %s88
    %p90 = scmp.eq.s32.totalorder %s89, 0
    %s92 = sadd.s32 %s91, 1
    %s93 = scalar_select %p90, %s91, %s92
    %p96 = pneg %p90
    %p97 = scmp.eq.s32.totalorder %s11, 1
    %p98 = por %p96, %p97
    %p99 = scmp.ne.s32.totalorder %s91, %s94
    %p100 = scmp.eq.s32.totalorder %s11, 0
    %p101 = por %p99, %p100
    %p102 = scmp.ne.s32.totalorder %s91, %s94
    %p103 = scmp.eq.s32.totalorder %s16, 1
    %p104 = por %p102, %p103
    %p105 = scmp.ne.s32.totalorder %s94, %s95
    %p106 = scmp.eq.s32.totalorder %s16, 0
    %p107 = por %p105, %p106
    %p108 = scmp.ne.s32.totalorder %s94, %s95
    %p109 = scmp.eq.s32.totalorder %s17, 1
    %p110 = por %p108, %p109
    %p112 = scmp.ne.s32.totalorder %s95, %s111
    %p113 = scmp.eq.s32.totalorder %s17, 0
    %p114 = por %p112, %p113
    %s115 = ssub.s32 %s18, %s30
    %s116 = ssub.s32 %s19, %s26
    %s117 = sor.u32 %s115, %s116
    %p118 = scmp.eq.s32.totalorder %s117, 0
    %s120 = sadd.s32 %s119, 1
    %s121 = scalar_select %p118, %s119, %s120
    %p124 = pneg %p118
    %p125 = scmp.eq.s32.totalorder %s11, 1
    %p126 = por %p124, %p125
    %p127 = scmp.ne.s32.totalorder %s119, %s122
    %p128 = scmp.eq.s32.totalorder %s11, 0
    %p129 = por %p127, %p128
    %p130 = scmp.ne.s32.totalorder %s119, %s122
    %p131 = scmp.eq.s32.totalorder %s16, 1
    %p132 = por %p130, %p131
    %p133 = scmp.ne.s32.totalorder %s122, %s123
    %p134 = scmp.eq.s32.totalorder %s16, 0
    %p135 = por %p133, %p134
    %p136 = scmp.ne.s32.totalorder %s122, %s123
    %p137 = scmp.eq.s32.totalorder %s17, 1
    %p138 = por %p136, %p137
    %p140 = scmp.ne.s32.totalorder %s123, %s139
    %p141 = scmp.eq.s32.totalorder %s17, 0
    %p142 = por %p140, %p141
    %s143 = ssub.s32 %s18, %s30
    %s144 = ssub.s32 %s19, %s26
    %s145 = sor.u32 %s143, %s144
    %p146 = scmp.eq.s32.totalorder %s145, 0
    %s148 = sadd.s32 %s147, 1
    %s149 = scalar_select %p146, %s147, %s148
    %p152 = pneg %p146
    %p153 = scmp.eq.s32.totalorder %s11, 1
    %p154 = por %p152, %p153
    %p155 = scmp.ne.s32.totalorder %s147, %s150
    %p156 = scmp.eq.s32.totalorder %s11, 0
    %p157 = por %p155, %p156
    %p158 = scmp.ne.s32.totalorder %s147, %s150
    %p159 = scmp.eq.s32.totalorder %s16, 1
    %p160 = por %p158, %p159
    %p161 = scmp.ne.s32.totalorder %s150, %s151
    %p162 = scmp.eq.s32.totalorder %s16, 0
    %p163 = por %p161, %p162
    %p164 = scmp.ne.s32.totalorder %s150, %s151
    %p165 = scmp.eq.s32.totalorder %s17, 1
    %p166 = por %p164, %p165
    %p168 = scmp.ne.s32.totalorder %s151, %s167
    %p169 = scmp.eq.s32.totalorder %s17, 0
    %p170 = por %p168, %p169
    %s171 = ssub.s32 %s18, %s30
    %s172 = ssub.s32 %s19, %s26
    %s173 = sor.u32 %s171, %s172
    %p174 = scmp.eq.s32.totalorder %s173, 0
    %s176 = sadd.s32 %s175, 1
    %s177 = scalar_select %p174, %s175, %s176
    %p180 = pneg %p174
    %p181 = scmp.eq.s32.totalorder %s11, 1
    %p182 = por %p180, %p181
    %p183 = scmp.ne.s32.totalorder %s175, %s178
    %p184 = scmp.eq.s32.totalorder %s11, 0
    %p185 = por %p183, %p184
    %p186 = scmp.ne.s32.totalorder %s175, %s178
    %p187 = scmp.eq.s32.totalorder %s16, 1
    %p188 = por %p186, %p187
    %p189 = scmp.ne.s32.totalorder %s178, %s179
    %p190 = scmp.eq.s32.totalorder %s16, 0
    %p191 = por %p189, %p190
    %p192 = scmp.ne.s32.totalorder %s178, %s179
    %p193 = scmp.eq.s32.totalorder %s17, 1
    %p194 = por %p192, %p193
    %p196 = scmp.ne.s32.totalorder %s179, %s195
    %p197 = scmp.eq.s32.totalorder %s17, 0
    %p198 = por %p196, %p197
    %p199 = scmp.le.s32.totalorder 1, %s11
    %p200 = scmp.lt.s32.totalorder %s11, 3
    %p201 = pnand %p199, %p200
    %p202 = pneg %p201
    // Predicated region
    $region9: #{prob_attention.3} parent=5 // pred_check
      _
    $region10: #{prob_attention.3} parent=5 // pred_check_branch
      %204 = sbr.rel (%p201) target = $region12
    $region11: #{prob_attention.3} parent=5 // pred_region
      %s205 = ssub.s32 %s11, 1
    $region12: #{prob_attention.3} parent=5 // pred_fallthru
      _
    %p206 = scmp.lt.s32.totalorder %s11, 2
    // Predicated region
    $region13: #{prob_attention.3} parent=5 // pred_check
      %p207 = pneg %p206
    $region14: #{prob_attention.3} parent=5 // pred_check_branch
      %209 = sbr.rel (%p207) target = $region16
    $region15: #{prob_attention.3} parent=5 // pred_region
      // Predicated region
      $region17: #{prob_attention.3} parent=15 // pred_check
        %p210 = pneg %p45
      $region18: #{prob_attention.3} parent=15 // pred_check_branch
        %212 = sbr.rel (%p210) target = $region20
      $region19: #{prob_attention.3} parent=15 // pred_region
        %s213 = smul.u32 4, %s19
        %p214 = scmp.lt.s32.totalorder %s18, 1
        %s215 = scalar_select %p214, %s18, 1
        %p216 = scmp.lt.s32.totalorder %s213, 3
        %s217 = scalar_select %p216, %s213, 3
        %s218 = smul.addr %s217, 2
        %s219 = smul.addr %s215, 8
        %s220 = sadd.s32 %s218, %s219
        %s221 = smul.addr %s220, 4
        %s222 = scalar_lea.vmem %s0, %s221
        %s223 = smul.u32 4, %s19
      $region20: #{prob_attention.3} parent=15 // pred_fallthru
        _
      // Predicated region
      $region21: #{prob_attention.3} parent=15 // pred_check
        %p224 = pneg %p73
      $region22: #{prob_attention.3} parent=15 // pred_check_branch
        %226 = sbr.rel (%p224) target = $region24
      $region23: #{prob_attention.3} parent=15 // pred_region
        %s227 = smul.u32 4, %s19
        %p228 = scmp.lt.s32.totalorder %s18, 1
        %s229 = scalar_select %p228, %s18, 1
        %p230 = scmp.lt.s32.totalorder %s227, 3
        %s231 = scalar_select %p230, %s227, 3
        %s232 = smul.addr %s231, 2
        %s233 = smul.addr %s229, 8
        %s234 = sadd.s32 %s232, %s233
        %s235 = smul.addr %s234, 4
        %s236 = scalar_lea.vmem %s1, %s235
        %s237 = smul.u32 4, %s19
      $region24: #{prob_attention.3} parent=15 // pred_fallthru
        _
      // Predicated region
      $region25: #{prob_attention.3} parent=15 // pred_check
        %p238 = pneg %p101
      $region26: #{prob_attention.3} parent=15 // pred_check_branch
        %240 = sbr.rel (%p238) target = $region28
      $region27: #{prob_attention.3} parent=15 // pred_region
        %s241 = smul.u32 4, %s19
        %p242 = scmp.lt.s32.totalorder %s18, 1
        %s243 = scalar_select %p242, %s18, 1
        %p244 = scmp.lt.s32.totalorder %s241, 3
        %s245 = scalar_select %p244, %s241, 3
        %s246 = smul.addr %s245, 2
        %s247 = smul.addr %s243, 8
        %s248 = sadd.s32 %s246, %s247
        %s249 = smul.addr %s248, 4
        %s250 = scalar_lea.vmem %s2, %s249
        %s251 = smul.u32 4, %s19
      $region28: #{prob_attention.3} parent=15 // pred_fallthru
        _
      // Predicated region
      $region29: #{prob_attention.3} parent=15 // pred_check
        %p252 = pneg %p129
      $region30: #{prob_attention.3} parent=15 // pred_check_branch
        %254 = sbr.rel (%p252) target = $region32
      $region31: #{prob_attention.3} parent=15 // pred_region
        %p255 = scmp.lt.s32.totalorder %s18, 1
        %s256 = scalar_select %p255, %s18, 1
        %p257 = scmp.lt.s32.totalorder %s19, 0
        %s258 = scalar_select %p257, %s19, 0
        %s259 = sadd.s32 %s258, %s256
        %s260 = smul.addr %s259, 4
        %s261 = scalar_lea.vmem %s3, %s260
      $region32: #{prob_attention.3} parent=15 // pred_fallthru
        _
      // Predicated region
      $region33: #{prob_attention.3} parent=15 // pred_check
        %p262 = pneg %p157
      $region34: #{prob_attention.3} parent=15 // pred_check_branch
        %264 = sbr.rel (%p262) target = $region36
      $region35: #{prob_attention.3} parent=15 // pred_region
        %p265 = scmp.lt.s32.totalorder %s18, 1
        %s266 = scalar_select %p265, %s18, 1
        %p267 = scmp.lt.s32.totalorder %s19, 0
        %s268 = scalar_select %p267, %s19, 0
        %s269 = smul.addr %s268, 2
        %s270 = smul.addr %s266, 2
        %s271 = sadd.s32 %s269, %s270
        %s272 = smul.addr %s271, 8
        %s273 = scalar_lea.vmem %s4, %s272
      $region36: #{prob_attention.3} parent=15 // pred_fallthru
        _
    $region16: #{prob_attention.3} parent=5 // pred_fallthru
      _
    %p274 = scmp.le.s32.totalorder 1, %s11
    %p275 = scmp.lt.s32.totalorder %s11, 3
    %p276 = pnand %p274, %p275
    %p277 = pneg %p276
    // Predicated region
    $region37: #{prob_attention.3} parent=5 // pred_check
      _
    $region38: #{prob_attention.3} parent=5 // pred_check_branch
      %279 = sbr.rel (%p276) target = $region40
    $region39: #{prob_attention.3} parent=5 // pred_region
      %s280 = ssub.s32 %s11, 1
      %s281 = smul.u32 4, %s21
      %p282 = scmp.lt.s32.totalorder %s20, 1
      %s283 = scalar_select %p282, %s20, 1
      %p284 = scmp.lt.s32.totalorder %s281, 3
      %s285 = scalar_select %p284, %s281, 3
      %s286 = smul.addr %s285, 2
      %s287 = smul.addr %s283, 8
      %s288 = sadd.s32 %s286, %s287
      %s289 = smul.addr %s288, 4
      %s290 = scalar_lea.vmem %s0, %s289
      %p291 = pneg %p51
      %p292 = pneg %p48
      %s293 = smul.u32 4, %s21
      %p294 = scmp.lt.s32.totalorder %s20, 1
      %s295 = scalar_select %p294, %s20, 1
      %p296 = scmp.lt.s32.totalorder %s293, 3
      %s297 = scalar_select %p296, %s293, 3
      %s298 = smul.addr %s297, 2
      %s299 = smul.addr %s295, 8
      %s300 = sadd.s32 %s298, %s299
      %s301 = smul.addr %s300, 4
      %s302 = scalar_lea.vmem %s1, %s301
      %p303 = pneg %p79
      %p304 = pneg %p76
      %s305 = smul.u32 4, %s21
      %p306 = scmp.lt.s32.totalorder %s20, 1
      %s307 = scalar_select %p306, %s20, 1
      %p308 = scmp.lt.s32.totalorder %s305, 3
      %s309 = scalar_select %p308, %s305, 3
      %s310 = smul.addr %s309, 2
      %s311 = smul.addr %s307, 8
      %s312 = sadd.s32 %s310, %s311
      %s313 = smul.addr %s312, 4
      %s314 = scalar_lea.vmem %s2, %s313
      %p315 = pneg %p107
      %p316 = pneg %p104
      %p317 = scmp.lt.s32.totalorder %s20, 1
      %s318 = scalar_select %p317, %s20, 1
      %p319 = scmp.lt.s32.totalorder %s21, 0
      %s320 = scalar_select %p319, %s21, 0
      %s321 = sadd.s32 %s320, %s318
      %s322 = smul.addr %s321, 4
      %s323 = scalar_lea.vmem %s3, %s322
      %p324 = pneg %p135
      %p325 = pneg %p132
      %p326 = scmp.lt.s32.totalorder %s20, 1
      %s327 = scalar_select %p326, %s20, 1
      %p328 = scmp.lt.s32.totalorder %s21, 0
      %s329 = scalar_select %p328, %s21, 0
      %s330 = smul.addr %s329, 2
      %s331 = smul.addr %s327, 2
      %s332 = sadd.s32 %s330, %s331
      %s333 = smul.addr %s332, 8
      %s334 = scalar_lea.vmem %s4, %s333
      %p335 = pneg %p163
      %p336 = pneg %p160
      %p337 = pneg %p191
      %p338 = pneg %p188
      %p339 = scmp.lt.s32.totalorder %s20, 1
      %s340 = scalar_select %p339, %s20, 1
      %p341 = scmp.lt.s32.totalorder %s21, 0
      %s342 = scalar_select %p341, %s21, 0
      %s343 = smul.addr %s342, 2
      %s344 = smul.addr %s340, 2
      %s345 = sadd.s32 %s343, %s344
      %s346 = smul.addr %s345, 8
      %s347 = scalar_lea.vmem %s5, %s346
      %s348 = smul.u32 4, %s21
      %p349 = scmp.lt.s32.totalorder %s20, 1
      %s350 = scalar_select %p349, %s20, 1
      %p351 = scmp.lt.s32.totalorder %s348, 3
      %s352 = scalar_select %p351, %s348, 3
      %s353 = smul.addr %s352, 2
      %s354 = smul.addr %s350, 8
      %s355 = sadd.s32 %s353, %s354
      %s356 = smul.addr %s355, 4
      %s357 = scalar_lea.vmem %s0, %s356
      %s358 = smul.u32 4, %s21
      %s359 = smul.u32 4, %s21
      %p360 = scmp.lt.s32.totalorder %s20, 1
      %s361 = scalar_select %p360, %s20, 1
      %p362 = scmp.lt.s32.totalorder %s359, 3
      %s363 = scalar_select %p362, %s359, 3
      %s364 = smul.addr %s363, 2
      %s365 = smul.addr %s361, 8
      %s366 = sadd.s32 %s364, %s365
      %s367 = smul.addr %s366, 4
      %s368 = scalar_lea.vmem %s1, %s367
      %s369 = smul.u32 4, %s21
      %s370 = smul.u32 4, %s21
      %p371 = scmp.lt.s32.totalorder %s20, 1
      %s372 = scalar_select %p371, %s20, 1
      %p373 = scmp.lt.s32.totalorder %s370, 3
      %s374 = scalar_select %p373, %s370, 3
      %s375 = smul.addr %s374, 2
      %s376 = smul.addr %s372, 8
      %s377 = sadd.s32 %s375, %s376
      %s378 = smul.addr %s377, 4
      %s379 = scalar_lea.vmem %s2, %s378
      %s380 = smul.u32 4, %s21
      %p381 = scmp.lt.s32.totalorder %s20, 1
      %s382 = scalar_select %p381, %s20, 1
      %p383 = scmp.lt.s32.totalorder %s21, 0
      %s384 = scalar_select %p383, %s21, 0
      %s385 = sadd.s32 %s384, %s382
      %s386 = smul.addr %s385, 4
      %s387 = scalar_lea.vmem %s3, %s386
      %p388 = scmp.lt.s32.totalorder %s20, 1
      %s389 = scalar_select %p388, %s20, 1
      %p390 = scmp.lt.s32.totalorder %s21, 0
      %s391 = scalar_select %p390, %s21, 0
      %s392 = smul.addr %s391, 2
      %s393 = smul.addr %s389, 2
      %s394 = sadd.s32 %s392, %s393
      %s395 = smul.addr %s394, 8
      %s396 = scalar_lea.vmem %s4, %s395
      %p397 = scmp.lt.s32.totalorder %s20, 1
      %s398 = scalar_select %p397, %s20, 1
      %p399 = scmp.lt.s32.totalorder %s21, 0
      %s400 = scalar_select %p399, %s21, 0
      %s401 = smul.addr %s400, 2
      %s402 = smul.addr %s398, 2
      %s403 = sadd.s32 %s401, %s402
      %s404 = smul.addr %s403, 8
      %s405 = scalar_lea.vmem %s5, %s404
      %v407 = vld [vmem:[%s357] sm:$0xf]
      %v408 = vld [vmem:[%s357 + $0x4] sm:$0xf]
      %v409 = vld [vmem:[%s357 + $0x8] sm:$0xf]
      %v410 = vld [vmem:[%s357 + $0xc] sm:$0xf]
      %v411 = vld [vmem:[%s357 + $0x10] sm:$0xf]
      %v412 = vld [vmem:[%s357 + $0x14] sm:$0xf]
      %v413 = vld [vmem:[%s357 + $0x18] sm:$0xf]
      %v414 = vld [vmem:[%s357 + $0x1c] sm:$0xf]
      %v415 = vld [vmem:[%s368] sm:$0xf]
      %v416 = vld [vmem:[%s368 + $0x4] sm:$0xf]
      %v417 = vld [vmem:[%s368 + $0x8] sm:$0xf]
      %v418 = vld [vmem:[%s368 + $0xc] sm:$0xf]
      %v419 = vld [vmem:[%s368 + $0x10] sm:$0xf]
      %v420 = vld [vmem:[%s368 + $0x14] sm:$0xf]
      %v421 = vld [vmem:[%s368 + $0x18] sm:$0xf]
      %v422 = vld [vmem:[%s368 + $0x1c] sm:$0xf]
      %v423 = vld [vmem:[%s379] sm:$0xf]
      %v424 = vld [vmem:[%s379 + $0x4] sm:$0xf]
      %v425 = vld [vmem:[%s379 + $0x8] sm:$0xf]
      %v426 = vld [vmem:[%s379 + $0xc] sm:$0xf]
      %v427 = vld [vmem:[%s379 + $0x10] sm:$0xf]
      %v428 = vld [vmem:[%s379 + $0x14] sm:$0xf]
      %v429 = vld [vmem:[%s379 + $0x18] sm:$0xf]
      %v430 = vld [vmem:[%s379 + $0x1c] sm:$0xf]
      %v431 = vld [vmem:[%s387] sm:$0xf]
      %v432 = vld [vmem:[%s396] sm:$0xff]
      %v433 = vld [vmem:[%s396 + $0x8] sm:$0xff]
      %v436 = vunpack.c.l.b16 %v407
      %v437 = vunpack.c.l.b16 %v408
      %v438 = vpack.c.b16 %v437, %v436
      %v441 = vunpack.c.l.b16 %v415
      %v442 = vunpack.c.l.b16 %v416
      %v443 = vpack.c.b16 %v442, %v441
      %vm444 = vcmask 261120
      %v446 = vsel %vm444, %v438, 0
      %v449 = vsel %vm444, %v443, 0
      %451 = vmatprep.subr.bf16.mxu0 0
      %452 = vmatpush1.bf16.xpose.msra.mxu0 0
      %453 = vmatprep.subr.bf16.mxu0 0
      %454 = vmatpush1.bf16.xpose.msra.mxu0 0
      %455 = vmatprep.subr.bf16.mxu0 0
      %456 = vmatpush1.bf16.xpose.msra.mxu0 0
      %457 = vmatprep.subr.bf16.mxu0 0
      %458 = vmatpush1.bf16.xpose.msra.mxu0 0
      %459 = vmatprep.subr.bf16.mxu0 0
      %460 = vmatpush1.bf16.xpose.msra.mxu0 0
      %461 = vmatprep.subr.bf16.mxu0 0
      %462 = vmatpush1.bf16.xpose.msra.mxu0 0
      %463 = vmatprep.subr.bf16.mxu0 0
      %464 = vmatpush1.bf16.xpose.msra.mxu0 0
      %465 = vmatprep.subr.bf16.mxu0 0
      %466 = vmatpush1.bf16.xpose.msra.mxu0 %v449
      %467 = vmatprep.subr.bf16.mxu0 0
      %468 = vmatpush2.bf16.xpose.msra.mxu0 0
      %469 = vmatprep.subr.bf16.mxu0 0
      %470 = vmatpush2.bf16.xpose.msra.mxu0 0
      %471 = vmatprep.subr.bf16.mxu0 0
      %472 = vmatpush2.bf16.xpose.msra.mxu0 0
      %473 = vmatprep.subr.bf16.mxu0 0
      %474 = vmatpush2.bf16.xpose.msra.mxu0 0
      %475 = vmatprep.subr.bf16.mxu0 0
      %476 = vmatpush2.bf16.xpose.msra.mxu0 0
      %477 = vmatprep.subr.bf16.mxu0 0
      %478 = vmatpush2.bf16.xpose.msra.mxu0 0
      %479 = vmatprep.subr.bf16.mxu0 0
      %480 = vmatpush2.bf16.xpose.msra.mxu0 0
      %481 = vmatprep.subr.bf16.mxu0 0
      %482 = vmatpush2.bf16.xpose.msra.mxu0 0
      %483 = vmatprep.mubr.bf16.mxu0 0
      %484 = vmatmul.mubr.bf16.gmra.mxu0 %v446
      %v485 = vpop.f32.mrf.mxu0
      %v486 = vadd.f32 0.0, %v485
      %v487 = vpop.f32.mrf.mxu0
      %v488 = vpop.f32.mrf.mxu0
      %v489 = vadd.f32 0.0, %v488
      %v490 = vpop.f32.mrf.mxu0
      %491 = vdwg.mxu0
      %v494 = vunpack.c.l.b16 %v409
      %v495 = vunpack.c.l.b16 %v410
      %v496 = vpack.c.b16 %v495, %v494
      %v499 = vunpack.c.l.b16 %v417
      %v500 = vunpack.c.l.b16 %v418
      %v501 = vpack.c.b16 %v500, %v499
      %v503 = vsel %vm444, %v496, 0
      %v506 = vsel %vm444, %v501, 0
      %508 = vmatprep.subr.bf16.mxu0 0
      %509 = vmatpush1.bf16.xpose.msra.mxu0 0
      %510 = vmatprep.subr.bf16.mxu0 0
      %511 = vmatpush1.bf16.xpose.msra.mxu0 0
      %512 = vmatprep.subr.bf16.mxu0 0
      %513 = vmatpush1.bf16.xpose.msra.mxu0 0
      %514 = vmatprep.subr.bf16.mxu0 0
      %515 = vmatpush1.bf16.xpose.msra.mxu0 0
      %516 = vmatprep.subr.bf16.mxu0 0
      %517 = vmatpush1.bf16.xpose.msra.mxu0 0
      %518 = vmatprep.subr.bf16.mxu0 0
      %519 = vmatpush1.bf16.xpose.msra.mxu0 0
      %520 = vmatprep.subr.bf16.mxu0 0
      %521 = vmatpush1.bf16.xpose.msra.mxu0 0
      %522 = vmatprep.subr.bf16.mxu0 0
      %523 = vmatpush1.bf16.xpose.msra.mxu0 %v506
      %524 = vmatprep.subr.bf16.mxu0 0
      %525 = vmatpush2.bf16.xpose.msra.mxu0 0
      %526 = vmatprep.subr.bf16.mxu0 0
      %527 = vmatpush2.bf16.xpose.msra.mxu0 0
      %528 = vmatprep.subr.bf16.mxu0 0
      %529 = vmatpush2.bf16.xpose.msra.mxu0 0
      %530 = vmatprep.subr.bf16.mxu0 0
      %531 = vmatpush2.bf16.xpose.msra.mxu0 0
      %532 = vmatprep.subr.bf16.mxu0 0
      %533 = vmatpush2.bf16.xpose.msra.mxu0 0
      %534 = vmatprep.subr.bf16.mxu0 0
      %535 = vmatpush2.bf16.xpose.msra.mxu0 0
      %536 = vmatprep.subr.bf16.mxu0 0
      %537 = vmatpush2.bf16.xpose.msra.mxu0 0
      %538 = vmatprep.subr.bf16.mxu0 0
      %539 = vmatpush2.bf16.xpose.msra.mxu0 0
      %540 = vmatprep.mubr.bf16.mxu0 0
      %541 = vmatmul.mubr.bf16.gmra.mxu0 %v503
      %v542 = vpop.f32.mrf.mxu0
      %v543 = vadd.f32 0.0, %v542
      %v544 = vpop.f32.mrf.mxu0
      %v545 = vpop.f32.mrf.mxu0
      %v546 = vadd.f32 0.0, %v545
      %v547 = vpop.f32.mrf.mxu0
      %548 = vdwg.mxu0
      %v551 = vunpack.c.l.b16 %v411
      %v552 = vunpack.c.l.b16 %v412
      %v553 = vpack.c.b16 %v552, %v551
      %v556 = vunpack.c.l.b16 %v419
      %v557 = vunpack.c.l.b16 %v420
      %v558 = vpack.c.b16 %v557, %v556
      %v560 = vsel %vm444, %v553, 0
      %v563 = vsel %vm444, %v558, 0
      %565 = vmatprep.subr.bf16.mxu0 0
      %566 = vmatpush1.bf16.xpose.msra.mxu0 0
      %567 = vmatprep.subr.bf16.mxu0 0
      %568 = vmatpush1.bf16.xpose.msra.mxu0 0
      %569 = vmatprep.subr.bf16.mxu0 0
      %570 = vmatpush1.bf16.xpose.msra.mxu0 0
      %571 = vmatprep.subr.bf16.mxu0 0
      %572 = vmatpush1.bf16.xpose.msra.mxu0 0
      %573 = vmatprep.subr.bf16.mxu0 0
      %574 = vmatpush1.bf16.xpose.msra.mxu0 0
      %575 = vmatprep.subr.bf16.mxu0 0
      %576 = vmatpush1.bf16.xpose.msra.mxu0 0
      %577 = vmatprep.subr.bf16.mxu0 0
      %578 = vmatpush1.bf16.xpose.msra.mxu0 0
      %579 = vmatprep.subr.bf16.mxu0 0
      %580 = vmatpush1.bf16.xpose.msra.mxu0 %v563
      %581 = vmatprep.subr.bf16.mxu0 0
      %582 = vmatpush2.bf16.xpose.msra.mxu0 0
      %583 = vmatprep.subr.bf16.mxu0 0
      %584 = vmatpush2.bf16.xpose.msra.mxu0 0
      %585 = vmatprep.subr.bf16.mxu0 0
      %586 = vmatpush2.bf16.xpose.msra.mxu0 0
      %587 = vmatprep.subr.bf16.mxu0 0
      %588 = vmatpush2.bf16.xpose.msra.mxu0 0
      %589 = vmatprep.subr.bf16.mxu0 0
      %590 = vmatpush2.bf16.xpose.msra.mxu0 0
      %591 = vmatprep.subr.bf16.mxu0 0
      %592 = vmatpush2.bf16.xpose.msra.mxu0 0
      %593 = vmatprep.subr.bf16.mxu0 0
      %594 = vmatpush2.bf16.xpose.msra.mxu0 0
      %595 = vmatprep.subr.bf16.mxu0 0
      %596 = vmatpush2.bf16.xpose.msra.mxu0 0
      %597 = vmatprep.mubr.bf16.mxu0 0
      %598 = vmatmul.mubr.bf16.gmra.mxu0 %v560
      %v599 = vpop.f32.mrf.mxu0
      %v600 = vadd.f32 0.0, %v599
      %v601 = vpop.f32.mrf.mxu0
      %v602 = vpop.f32.mrf.mxu0
      %v603 = vadd.f32 0.0, %v602
      %v604 = vpop.f32.mrf.mxu0
      %605 = vdwg.mxu0
      %v608 = vunpack.c.l.b16 %v413
      %v609 = vunpack.c.l.b16 %v414
      %v610 = vpack.c.b16 %v609, %v608
      %v613 = vunpack.c.l.b16 %v421
      %v614 = vunpack.c.l.b16 %v422
      %v615 = vpack.c.b16 %v614, %v613
      %v617 = vsel %vm444, %v610, 0
      %v620 = vsel %vm444, %v615, 0
      %622 = vmatprep.subr.bf16.mxu0 0
      %623 = vmatpush1.bf16.xpose.msra.mxu0 0
      %624 = vmatprep.subr.bf16.mxu0 0
      %625 = vmatpush1.bf16.xpose.msra.mxu0 0
      %626 = vmatprep.subr.bf16.mxu0 0
      %627 = vmatpush1.bf16.xpose.msra.mxu0 0
      %628 = vmatprep.subr.bf16.mxu0 0
      %629 = vmatpush1.bf16.xpose.msra.mxu0 0
      %630 = vmatprep.subr.bf16.mxu0 0
      %631 = vmatpush1.bf16.xpose.msra.mxu0 0
      %632 = vmatprep.subr.bf16.mxu0 0
      %633 = vmatpush1.bf16.xpose.msra.mxu0 0
      %634 = vmatprep.subr.bf16.mxu0 0
      %635 = vmatpush1.bf16.xpose.msra.mxu0 0
      %636 = vmatprep.subr.bf16.mxu0 0
      %637 = vmatpush1.bf16.xpose.msra.mxu0 %v620
      %638 = vmatprep.subr.bf16.mxu0 0
      %639 = vmatpush2.bf16.xpose.msra.mxu0 0
      %640 = vmatprep.subr.bf16.mxu0 0
      %641 = vmatpush2.bf16.xpose.msra.mxu0 0
      %642 = vmatprep.subr.bf16.mxu0 0
      %643 = vmatpush2.bf16.xpose.msra.mxu0 0
      %644 = vmatprep.subr.bf16.mxu0 0
      %645 = vmatpush2.bf16.xpose.msra.mxu0 0
      %646 = vmatprep.subr.bf16.mxu0 0
      %647 = vmatpush2.bf16.xpose.msra.mxu0 0
      %648 = vmatprep.subr.bf16.mxu0 0
      %649 = vmatpush2.bf16.xpose.msra.mxu0 0
      %650 = vmatprep.subr.bf16.mxu0 0
      %651 = vmatpush2.bf16.xpose.msra.mxu0 0
      %652 = vmatprep.subr.bf16.mxu0 0
      %653 = vmatpush2.bf16.xpose.msra.mxu0 0
      %654 = vmatprep.mubr.bf16.mxu0 0
      %655 = vmatmul.mubr.bf16.gmra.mxu0 %v617
      %v656 = vpop.f32.mrf.mxu0
      %v657 = vadd.f32 0.0, %v656
      %v658 = vpop.f32.mrf.mxu0
      %v659 = vpop.f32.mrf.mxu0
      %v660 = vadd.f32 0.0, %v659
      %v661 = vpop.f32.mrf.mxu0
      %662 = vdwg.mxu0
      %v663 = vlaneseq
      %v664 = vand.u32 %v663, 127
      %v665 = vlaneseq
      %v666 = vshrl.u32 %v665, 7
      %v667 = vsub.s32 0, %v666
      %v668 = vrot.slane %v431, %v667
      %670 = vbcast.lane.b32.xlu0 %v668, 256
      %v671 = vpop.permute.xlu0 %670
      %s673 = sor.u32 256, 8
      %674 = vbcast.lane.b32.xlu0 %v668, %s673
      %v675 = vpop.permute.xlu0 %674
      %v676 = vlaneseq
      %v677 = vshrl.u32 %v676, 7
      %v678 = vsub.s32 1, %v677
      %v679 = vrot.slane %v431, %v678
      %681 = vbcast.lane.b32.xlu0 %v679, 256
      %v682 = vpop.permute.xlu0 %681
      %s684 = sor.u32 256, 8
      %685 = vbcast.lane.b32.xlu0 %v679, %s684
      %v686 = vpop.permute.xlu0 %685
      %v687 = vlaneseq
      %v688 = vshrl.u32 %v687, 7
      %v689 = vsub.s32 2, %v688
      %v690 = vrot.slane %v431, %v689
      %692 = vbcast.lane.b32.xlu0 %v690, 256
      %v693 = vpop.permute.xlu0 %692
      %s695 = sor.u32 256, 8
      %696 = vbcast.lane.b32.xlu0 %v690, %s695
      %v697 = vpop.permute.xlu0 %696
      %v698 = vlaneseq
      %v699 = vshrl.u32 %v698, 7
      %v700 = vsub.s32 3, %v699
      %v701 = vrot.slane %v431, %v700
      %703 = vbcast.lane.b32.xlu0 %v701, 256
      %v704 = vpop.permute.xlu0 %703
      %s706 = sor.u32 256, 8
      %707 = vbcast.lane.b32.xlu0 %v701, %s706
      %v708 = vpop.permute.xlu0 %707
      %vm709 = vcmp.gt.s32.totalorder %v664, %v671
      %vm710 = vcmp.gt.s32.totalorder %v664, %v675
      %vm711 = vcmp.gt.s32.totalorder %v664, %v682
      %vm712 = vcmp.gt.s32.totalorder %v664, %v686
      %vm713 = vcmp.gt.s32.totalorder %v664, %v693
      %vm714 = vcmp.gt.s32.totalorder %v664, %v697
      %vm715 = vcmp.gt.s32.totalorder %v664, %v704
      %vm716 = vcmp.gt.s32.totalorder %v664, %v708
      %v717 = vsel %vm709, -1e+30, %v486
      %v718 = vsel %vm710, -1e+30, %v489
      %v719 = vsel %vm711, -1e+30, %v543
      %v720 = vsel %vm712, -1e+30, %v546
      %v721 = vsel %vm713, -1e+30, %v600
      %v722 = vsel %vm714, -1e+30, %v603
      %v723 = vsel %vm715, -1e+30, %v657
      %v724 = vsel %vm716, -1e+30, %v660
      %vm725 = vcmask 130048
      %v726 = vsel %vm725, %v717, -inf
      %727 = vmax.xlane.f32.xlu0 %v726
      %v728 = vpop.xlane.xlu0 %727
      %vm729 = vcmask 129024
      %v730 = vsel %vm729, %v718, -inf
      %731 = vmax.xlane.f32.xlu0 %v730
      %v732 = vpop.xlane.xlu0 %731
      %v733 = vsel %vm725, %v719, -inf
      %734 = vmax.xlane.f32.xlu0 %v733
      %v735 = vpop.xlane.xlu0 %734
      %v736 = vsel %vm729, %v720, -inf
      %737 = vmax.xlane.f32.xlu0 %v736
      %v738 = vpop.xlane.xlu0 %737
      %v739 = vsel %vm725, %v721, -inf
      %740 = vmax.xlane.f32.xlu0 %v739
      %v741 = vpop.xlane.xlu0 %740
      %v742 = vsel %vm729, %v722, -inf
      %743 = vmax.xlane.f32.xlu0 %v742
      %v744 = vpop.xlane.xlu0 %743
      %v745 = vsel %vm725, %v723, -inf
      %746 = vmax.xlane.f32.xlu0 %v745
      %v747 = vpop.xlane.xlu0 %746
      %v748 = vsel %vm729, %v724, -inf
      %749 = vmax.xlane.f32.xlu0 %v748
      %v750 = vpop.xlane.xlu0 %749
      %v751 = vsub.f32 %v717, %v728
      %v752 = vsub.f32 %v718, %v732
      %v753 = vsub.f32 %v719, %v735
      %v754 = vsub.f32 %v720, %v738
      %v755 = vsub.f32 %v721, %v741
      %v756 = vsub.f32 %v722, %v744
      %v757 = vsub.f32 %v723, %v747
      %v758 = vsub.f32 %v724, %v750
      %v759 = vmul.f32 %v751, 1.442695
      %v760 = vpow.pop %v759
      %v761 = vmul.f32 %v752, 1.442695
      %v762 = vpow.pop %v761
      %v763 = vmul.f32 %v753, 1.442695
      %v764 = vpow.pop %v763
      %v765 = vmul.f32 %v754, 1.442695
      %v766 = vpow.pop %v765
      %v767 = vmul.f32 %v755, 1.442695
      %v768 = vpow.pop %v767
      %v769 = vmul.f32 %v756, 1.442695
      %v770 = vpow.pop %v769
      %v771 = vmul.f32 %v757, 1.442695
      %v772 = vpow.pop %v771
      %v773 = vmul.f32 %v758, 1.442695
      %v774 = vpow.pop %v773
      %v775 = vsel %vm725, %v760, 0.0
      %776 = vadd.xlane.f32.xlu0 %v775
      %v777 = vpop.xlane.xlu0 %776
      %v778 = vsel %vm729, %v762, 0.0
      %779 = vadd.xlane.f32.xlu0 %v778
      %v780 = vpop.xlane.xlu0 %779
      %v781 = vsel %vm725, %v764, 0.0
      %782 = vadd.xlane.f32.xlu0 %v781
      %v783 = vpop.xlane.xlu0 %782
      %v784 = vsel %vm729, %v766, 0.0
      %785 = vadd.xlane.f32.xlu0 %v784
      %v786 = vpop.xlane.xlu0 %785
      %v787 = vsel %vm725, %v768, 0.0
      %788 = vadd.xlane.f32.xlu0 %v787
      %v789 = vpop.xlane.xlu0 %788
      %v790 = vsel %vm729, %v770, 0.0
      %791 = vadd.xlane.f32.xlu0 %v790
      %v792 = vpop.xlane.xlu0 %791
      %v793 = vsel %vm725, %v772, 0.0
      %794 = vadd.xlane.f32.xlu0 %v793
      %v795 = vpop.xlane.xlu0 %794
      %v796 = vsel %vm729, %v774, 0.0
      %797 = vadd.xlane.f32.xlu0 %v796
      %v798 = vpop.xlane.xlu0 %797
      %v799 = vrcp.pop %v777
      %v800 = vrcp.pop %v780
      %v801 = vrcp.pop %v783
      %v802 = vrcp.pop %v786
      %v803 = vrcp.pop %v789
      %v804 = vrcp.pop %v792
      %v805 = vrcp.pop %v795
      %v806 = vrcp.pop %v798
      %v807 = vmul.f32 %v760, %v799
      %v808 = vmul.f32 %v762, %v800
      %v809 = vmul.f32 %v764, %v801
      %v810 = vmul.f32 %v766, %v802
      %v811 = vmul.f32 %v768, %v803
      %v812 = vmul.f32 %v770, %v804
      %v813 = vmul.f32 %v772, %v805
      %v814 = vmul.f32 %v774, %v806
      %v815 = vpack.c.bf16 %v808, %v807
      %v816 = vpack.c.bf16 %v810, %v809
      %v817 = vpack.c.bf16 %v812, %v811
      %v818 = vpack.c.bf16 %v814, %v813
      %v821 = vunpack.c.l.b16 %v423
      %v822 = vunpack.c.l.b16 %v424
      %v823 = vpack.c.b16 %v822, %v821
      %v826 = vsel %vm725, %v815, 0
      %828 = vmatprep.subr.bf16.mxu0 0
      %829 = vmatpush1.bf16.msra.mxu0 0
      %830 = vmatprep.subr.bf16.mxu0 0
      %831 = vmatpush1.bf16.msra.mxu0 0
      %832 = vmatprep.subr.bf16.mxu0 0
      %833 = vmatpush1.bf16.msra.mxu0 0
      %834 = vmatprep.subr.bf16.mxu0 0
      %835 = vmatpush1.bf16.msra.mxu0 0
      %836 = vmatprep.subr.bf16.mxu0 0
      %837 = vmatpush1.bf16.msra.mxu0 0
      %838 = vmatprep.subr.bf16.mxu0 0
      %839 = vmatpush1.bf16.msra.mxu0 0
      %840 = vmatprep.subr.bf16.mxu0 0
      %841 = vmatpush1.bf16.msra.mxu0 0
      %842 = vmatprep.subr.bf16.mxu0 0
      %843 = vmatpush1.bf16.msra.mxu0 %v823
      %844 = vmatprep.subr.bf16.mxu0 0
      %845 = vmatpush2.bf16.msra.mxu0 0
      %846 = vmatprep.subr.bf16.mxu0 0
      %847 = vmatpush2.bf16.msra.mxu0 0
      %848 = vmatprep.subr.bf16.mxu0 0
      %849 = vmatpush2.bf16.msra.mxu0 0
      %850 = vmatprep.subr.bf16.mxu0 0
      %851 = vmatpush2.bf16.msra.mxu0 0
      %852 = vmatprep.subr.bf16.mxu0 0
      %853 = vmatpush2.bf16.msra.mxu0 0
      %854 = vmatprep.subr.bf16.mxu0 0
      %855 = vmatpush2.bf16.msra.mxu0 0
      %856 = vmatprep.subr.bf16.mxu0 0
      %857 = vmatpush2.bf16.msra.mxu0 0
      %858 = vmatprep.subr.bf16.mxu0 0
      %859 = vmatpush2.bf16.msra.mxu0 0
      %860 = vmatprep.mubr.bf16.mxu0 0
      %861 = vmatmul.mubr.bf16.gmra.mxu0 %v826
      %v862 = vpop.f32.mrf.mxu0
      %v863 = vadd.f32 0.0, %v862
      %v864 = vpop.f32.mrf.mxu0
      %v865 = vpop.f32.mrf.mxu0
      %v866 = vadd.f32 0.0, %v865
      %v867 = vpop.f32.mrf.mxu0
      %868 = vdwg.mxu0
      %v871 = vunpack.c.l.b16 %v425
      %v872 = vunpack.c.l.b16 %v426
      %v873 = vpack.c.b16 %v872, %v871
      %v876 = vsel %vm725, %v816, 0
      %878 = vmatprep.subr.bf16.mxu0 0
      %879 = vmatpush1.bf16.msra.mxu0 0
      %880 = vmatprep.subr.bf16.mxu0 0
      %881 = vmatpush1.bf16.msra.mxu0 0
      %882 = vmatprep.subr.bf16.mxu0 0
      %883 = vmatpush1.bf16.msra.mxu0 0
      %884 = vmatprep.subr.bf16.mxu0 0
      %885 = vmatpush1.bf16.msra.mxu0 0
      %886 = vmatprep.subr.bf16.mxu0 0
      %887 = vmatpush1.bf16.msra.mxu0 0
      %888 = vmatprep.subr.bf16.mxu0 0
      %889 = vmatpush1.bf16.msra.mxu0 0
      %890 = vmatprep.subr.bf16.mxu0 0
      %891 = vmatpush1.bf16.msra.mxu0 0
      %892 = vmatprep.subr.bf16.mxu0 0
      %893 = vmatpush1.bf16.msra.mxu0 %v873
      %894 = vmatprep.subr.bf16.mxu0 0
      %895 = vmatpush2.bf16.msra.mxu0 0
      %896 = vmatprep.subr.bf16.mxu0 0
      %897 = vmatpush2.bf16.msra.mxu0 0
      %898 = vmatprep.subr.bf16.mxu0 0
      %899 = vmatpush2.bf16.msra.mxu0 0
      %900 = vmatprep.subr.bf16.mxu0 0
      %901 = vmatpush2.bf16.msra.mxu0 0
      %902 = vmatprep.subr.bf16.mxu0 0
      %903 = vmatpush2.bf16.msra.mxu0 0
      %904 = vmatprep.subr.bf16.mxu0 0
      %905 = vmatpush2.bf16.msra.mxu0 0
      %906 = vmatprep.subr.bf16.mxu0 0
      %907 = vmatpush2.bf16.msra.mxu0 0
      %908 = vmatprep.subr.bf16.mxu0 0
      %909 = vmatpush2.bf16.msra.mxu0 0
      %910 = vmatprep.mubr.bf16.mxu0 0
      %911 = vmatmul.mubr.bf16.gmra.mxu0 %v876
      %v912 = vpop.f32.mrf.mxu0
      %v913 = vadd.f32 0.0, %v912
      %v914 = vpop.f32.mrf.mxu0
      %v915 = vpop.f32.mrf.mxu0
      %v916 = vadd.f32 0.0, %v915
      %v917 = vpop.f32.mrf.mxu0
      %918 = vdwg.mxu0
      %v921 = vunpack.c.l.b16 %v427
      %v922 = vunpack.c.l.b16 %v428
      %v923 = vpack.c.b16 %v922, %v921
      %v926 = vsel %vm725, %v817, 0
      %928 = vmatprep.subr.bf16.mxu0 0
      %929 = vmatpush1.bf16.msra.mxu0 0
      %930 = vmatprep.subr.bf16.mxu0 0
      %931 = vmatpush1.bf16.msra.mxu0 0
      %932 = vmatprep.subr.bf16.mxu0 0
      %933 = vmatpush1.bf16.msra.mxu0 0
      %934 = vmatprep.subr.bf16.mxu0 0
      %935 = vmatpush1.bf16.msra.mxu0 0
      %936 = vmatprep.subr.bf16.mxu0 0
      %937 = vmatpush1.bf16.msra.mxu0 0
      %938 = vmatprep.subr.bf16.mxu0 0
      %939 = vmatpush1.bf16.msra.mxu0 0
      %940 = vmatprep.subr.bf16.mxu0 0
      %941 = vmatpush1.bf16.msra.mxu0 0
      %942 = vmatprep.subr.bf16.mxu0 0
      %943 = vmatpush1.bf16.msra.mxu0 %v923
      %944 = vmatprep.subr.bf16.mxu0 0
      %945 = vmatpush2.bf16.msra.mxu0 0
      %946 = vmatprep.subr.bf16.mxu0 0
      %947 = vmatpush2.bf16.msra.mxu0 0
      %948 = vmatprep.subr.bf16.mxu0 0
      %949 = vmatpush2.bf16.msra.mxu0 0
      %950 = vmatprep.subr.bf16.mxu0 0
      %951 = vmatpush2.bf16.msra.mxu0 0
      %952 = vmatprep.subr.bf16.mxu0 0
      %953 = vmatpush2.bf16.msra.mxu0 0
      %954 = vmatprep.subr.bf16.mxu0 0
      %955 = vmatpush2.bf16.msra.mxu0 0
      %956 = vmatprep.subr.bf16.mxu0 0
      %957 = vmatpush2.bf16.msra.mxu0 0
      %958 = vmatprep.subr.bf16.mxu0 0
      %959 = vmatpush2.bf16.msra.mxu0 0
      %960 = vmatprep.mubr.bf16.mxu0 0
      %961 = vmatmul.mubr.bf16.gmra.mxu0 %v926
      %v962 = vpop.f32.mrf.mxu0
      %v963 = vadd.f32 0.0, %v962
      %v964 = vpop.f32.mrf.mxu0
      %v965 = vpop.f32.mrf.mxu0
      %v966 = vadd.f32 0.0, %v965
      %v967 = vpop.f32.mrf.mxu0
      %968 = vdwg.mxu0
      %v971 = vunpack.c.l.b16 %v429
      %v972 = vunpack.c.l.b16 %v430
      %v973 = vpack.c.b16 %v972, %v971
      %v976 = vsel %vm725, %v818, 0
      %978 = vmatprep.subr.bf16.mxu0 0
      %979 = vmatpush1.bf16.msra.mxu0 0
      %980 = vmatprep.subr.bf16.mxu0 0
      %981 = vmatpush1.bf16.msra.mxu0 0
      %982 = vmatprep.subr.bf16.mxu0 0
      %983 = vmatpush1.bf16.msra.mxu0 0
      %984 = vmatprep.subr.bf16.mxu0 0
      %985 = vmatpush1.bf16.msra.mxu0 0
      %986 = vmatprep.subr.bf16.mxu0 0
      %987 = vmatpush1.bf16.msra.mxu0 0
      %988 = vmatprep.subr.bf16.mxu0 0
      %989 = vmatpush1.bf16.msra.mxu0 0
      %990 = vmatprep.subr.bf16.mxu0 0
      %991 = vmatpush1.bf16.msra.mxu0 0
      %992 = vmatprep.subr.bf16.mxu0 0
      %993 = vmatpush1.bf16.msra.mxu0 %v973
      %994 = vmatprep.subr.bf16.mxu0 0
      %995 = vmatpush2.bf16.msra.mxu0 0
      %996 = vmatprep.subr.bf16.mxu0 0
      %997 = vmatpush2.bf16.msra.mxu0 0
      %998 = vmatprep.subr.bf16.mxu0 0
      %999 = vmatpush2.bf16.msra.mxu0 0
      %1000 = vmatprep.subr.bf16.mxu0 0
      %1001 = vmatpush2.bf16.msra.mxu0 0
      %1002 = vmatprep.subr.bf16.mxu0 0
      %1003 = vmatpush2.bf16.msra.mxu0 0
      %1004 = vmatprep.subr.bf16.mxu0 0
      %1005 = vmatpush2.bf16.msra.mxu0 0
      %1006 = vmatprep.subr.bf16.mxu0 0
      %1007 = vmatpush2.bf16.msra.mxu0 0
      %1008 = vmatprep.subr.bf16.mxu0 0
      %1009 = vmatpush2.bf16.msra.mxu0 0
      %1010 = vmatprep.mubr.bf16.mxu0 0
      %1011 = vmatmul.mubr.bf16.gmra.mxu0 %v976
      %v1012 = vpop.f32.mrf.mxu0
      %v1013 = vadd.f32 0.0, %v1012
      %v1014 = vpop.f32.mrf.mxu0
      %v1015 = vpop.f32.mrf.mxu0
      %v1016 = vadd.f32 0.0, %v1015
      %v1017 = vpop.f32.mrf.mxu0
      %1018 = vdwg.mxu0
      %v1019 = vlaneseq
      %v1020 = vshrl.u32 %v1019, 7
      %v1021 = vadd.s32 %v1020, 8
      %v1023 = vunpack.c.l.s4 1966171168
      %v1024 = vunpack.c.0.s8 %v1023
      %v1025 = vlaneseq
      %v1026 = vshrl.u32 %v1025, 7
      %v1027 = vsub.s32 %v1024, %v1026
      %v1028 = vrot.slane %v431, %v1027
      %v1029 = vcombine.high %v1028, %v1028
      %v1031 = vunpack.c.l.s4 1966171168
      %v1032 = vunpack.c.0.s8 %v1031
      %v1033 = vlaneseq
      %v1034 = vshrl.u32 %v1033, 7
      %v1035 = vsub.s32 %v1032, %v1034
      %v1036 = vrot.slane %v1028, %v1035
      %v1038 = vunpack.c.l.s4 1966171168
      %v1039 = vunpack.c.0.s8 %v1038
      %v1040 = vlaneseq
      %v1041 = vshrl.u32 %v1040, 7
      %v1042 = vsub.s32 %v1039, %v1041
      %v1043 = vrot.slane %v1029, %v1042
      %v1044 = vcombine.high %v1036, %v1036
      %v1045 = vcombine.high %v1043, %v1043
      %v1046 = vlaneseq
      %v1047 = vshrl.u32 %v1046, 7
      %v1048 = vsub.s32 0, %v1047
      %v1049 = vrot.slane %v1036, %v1048
      %v1050 = vlaneseq
      %v1051 = vshrl.u32 %v1050, 7
      %v1052 = vsub.s32 0, %v1051
      %v1053 = vrot.slane %v1043, %v1052
      %v1054 = vlaneseq
      %v1055 = vshrl.u32 %v1054, 7
      %v1056 = vsub.s32 0, %v1055
      %v1057 = vrot.slane %v1044, %v1056
      %v1058 = vlaneseq
      %v1059 = vshrl.u32 %v1058, 7
      %v1060 = vsub.s32 0, %v1059
      %v1061 = vrot.slane %v1045, %v1060
      %vm1062 = vcmp.eq.s32.totalorder %v1020, %v1049
      %vm1063 = vcmp.eq.s32.totalorder %v1021, %v1049
      %vm1064 = vcmp.eq.s32.totalorder %v1020, %v1053
      %vm1065 = vcmp.eq.s32.totalorder %v1021, %v1053
      %vm1066 = vcmp.eq.s32.totalorder %v1020, %v1057
      %vm1067 = vcmp.eq.s32.totalorder %v1021, %v1057
      %vm1068 = vcmp.eq.s32.totalorder %v1020, %v1061
      %vm1069 = vcmp.eq.s32.totalorder %v1021, %v1061
      %v1070 = vsel %vm1062, 1, 0
      %v1071 = vsel %vm1063, 1, 0
      %v1072 = vsel %vm1064, 1, 0
      %v1073 = vsel %vm1065, 1, 0
      %v1074 = vsel %vm1066, 1, 0
      %v1075 = vsel %vm1067, 1, 0
      %v1076 = vsel %vm1068, 1, 0
      %v1077 = vsel %vm1069, 1, 0
      %v1078 = vcvt.s32.f32 %v1070
      %v1079 = vcvt.s32.f32 %v1071
      %v1080 = vcvt.s32.f32 %v1072
      %v1081 = vcvt.s32.f32 %v1073
      %v1082 = vcvt.s32.f32 %v1074
      %v1083 = vcvt.s32.f32 %v1075
      %v1084 = vcvt.s32.f32 %v1076
      %v1085 = vcvt.s32.f32 %v1077
      %vm1086 = vcmask 121856
      %v1088 = vsel %vm1086, %v1078, 0
      %v1091 = vsel %vm1086, %v1079, 0
      %vm1093 = vcmask 1046528
      %v1095 = vsel %vm1093, %v866, 0
      %1097 = vmatprep.subr.mxu0 0.0
      %1098 = vmatpush1.msra.mxu0 0.0
      %1099 = vmatprep.subr.mxu0 0.0
      %1100 = vmatpush1.msra.mxu0 0.0
      %1101 = vmatprep.subr.mxu0 0.0
      %1102 = vmatpush1.msra.mxu0 0.0
      %1103 = vmatprep.subr.mxu0 0.0
      %1104 = vmatpush1.msra.mxu0 0.0
      %1105 = vmatprep.subr.mxu0 0.0
      %1106 = vmatpush1.msra.mxu0 0.0
      %1107 = vmatprep.subr.mxu0 0.0
      %1108 = vmatpush1.msra.mxu0 0.0
      %1109 = vmatprep.subr.mxu0 0.0
      %1110 = vmatpush1.msra.mxu0 0.0
      %1111 = vmatprep.subr.mxu0 0.0
      %1112 = vmatpush1.msra.mxu0 0.0
      %1113 = vmatprep.subr.mxu0 0.0
      %1114 = vmatpush1.msra.mxu0 0.0
      %1115 = vmatprep.subr.mxu0 0.0
      %1116 = vmatpush1.msra.mxu0 0.0
      %1117 = vmatprep.subr.mxu0 0.0
      %1118 = vmatpush1.msra.mxu0 0.0
      %1119 = vmatprep.subr.mxu0 0.0
      %1120 = vmatpush1.msra.mxu0 0.0
      %1121 = vmatprep.subr.mxu0 0.0
      %1122 = vmatpush1.msra.mxu0 0.0
      %1123 = vmatprep.subr.mxu0 0.0
      %1124 = vmatpush1.msra.mxu0 0.0
      %1125 = vmatprep.subr.mxu0 0.0
      %1126 = vmatpush1.msra.mxu0 %v1095
      %1127 = vmatprep.subr.mxu0 0.0
      %1128 = vmatpush1.msra.mxu0 %v863
      %1129 = vmatprep.subr.mxu0 0.0
      %1130 = vmatpush2.msra.mxu0 0.0
      %1131 = vmatprep.subr.mxu0 0.0
      %1132 = vmatpush2.msra.mxu0 0.0
      %1133 = vmatprep.subr.mxu0 0.0
      %1134 = vmatpush2.msra.mxu0 0.0
      %1135 = vmatprep.subr.mxu0 0.0
      %1136 = vmatpush2.msra.mxu0 0.0
      %1137 = vmatprep.subr.mxu0 0.0
      %1138 = vmatpush2.msra.mxu0 0.0
      %1139 = vmatprep.subr.mxu0 0.0
      %1140 = vmatpush2.msra.mxu0 0.0
      %1141 = vmatprep.subr.mxu0 0.0
      %1142 = vmatpush2.msra.mxu0 0.0
      %1143 = vmatprep.subr.mxu0 0.0
      %1144 = vmatpush2.msra.mxu0 0.0
      %1145 = vmatprep.subr.mxu0 0.0
      %1146 = vmatpush2.msra.mxu0 0.0
      %1147 = vmatprep.subr.mxu0 0.0
      %1148 = vmatpush2.msra.mxu0 0.0
      %1149 = vmatprep.subr.mxu0 0.0
      %1150 = vmatpush2.msra.mxu0 0.0
      %1151 = vmatprep.subr.mxu0 0.0
      %1152 = vmatpush2.msra.mxu0 0.0
      %1153 = vmatprep.subr.mxu0 0.0
      %1154 = vmatpush2.msra.mxu0 0.0
      %1155 = vmatprep.subr.mxu0 0.0
      %1156 = vmatpush2.msra.mxu0 0.0
      %1157 = vmatprep.subr.mxu0 0.0
      %1158 = vmatpush2.msra.mxu0 0.0
      %1159 = vmatprep.subr.mxu0 0.0
      %1160 = vmatpush2.msra.mxu0 0.0
      %1161 = vmatprep.mubr.f32.mxu0 0.0
      %1162 = vmatmul.mubr.f32.gmra.mxu0 %v1088
      %v1163 = vpop.f32.mrf.mxu0
      %v1164 = vadd.f32 0.0, %v1163
      %v1165 = vpop.f32.mrf.mxu0
      %1166 = vmatprep.mubr.f32.mxu0 0.0
      %1167 = vmatmul.mubr.f32.gmra.mxu0 %v1091
      %v1168 = vpop.f32.mrf.mxu0
      %v1169 = vadd.f32 0.0, %v1168
      %v1170 = vpop.f32.mrf.mxu0
      %1171 = vdwg.mxu0
      %v1173 = vsel %vm1086, %v1080, 0
      %v1176 = vsel %vm1086, %v1081, 0
      %v1179 = vsel %vm1093, %v916, 0
      %1181 = vmatprep.subr.mxu0 0.0
      %1182 = vmatpush1.msra.mxu0 0.0
      %1183 = vmatprep.subr.mxu0 0.0
      %1184 = vmatpush1.msra.mxu0 0.0
      %1185 = vmatprep.subr.mxu0 0.0
      %1186 = vmatpush1.msra.mxu0 0.0
      %1187 = vmatprep.subr.mxu0 0.0
      %1188 = vmatpush1.msra.mxu0 0.0
      %1189 = vmatprep.subr.mxu0 0.0
      %1190 = vmatpush1.msra.mxu0 0.0
      %1191 = vmatprep.subr.mxu0 0.0
      %1192 = vmatpush1.msra.mxu0 0.0
      %1193 = vmatprep.subr.mxu0 0.0
      %1194 = vmatpush1.msra.mxu0 0.0
      %1195 = vmatprep.subr.mxu0 0.0
      %1196 = vmatpush1.msra.mxu0 0.0
      %1197 = vmatprep.subr.mxu0 0.0
      %1198 = vmatpush1.msra.mxu0 0.0
      %1199 = vmatprep.subr.mxu0 0.0
      %1200 = vmatpush1.msra.mxu0 0.0
      %1201 = vmatprep.subr.mxu0 0.0
      %1202 = vmatpush1.msra.mxu0 0.0
      %1203 = vmatprep.subr.mxu0 0.0
      %1204 = vmatpush1.msra.mxu0 0.0
      %1205 = vmatprep.subr.mxu0 0.0
      %1206 = vmatpush1.msra.mxu0 0.0
      %1207 = vmatprep.subr.mxu0 0.0
      %1208 = vmatpush1.msra.mxu0 0.0
      %1209 = vmatprep.subr.mxu0 0.0
      %1210 = vmatpush1.msra.mxu0 %v1179
      %1211 = vmatprep.subr.mxu0 0.0
      %1212 = vmatpush1.msra.mxu0 %v913
      %1213 = vmatprep.subr.mxu0 0.0
      %1214 = vmatpush2.msra.mxu0 0.0
      %1215 = vmatprep.subr.mxu0 0.0
      %1216 = vmatpush2.msra.mxu0 0.0
      %1217 = vmatprep.subr.mxu0 0.0
      %1218 = vmatpush2.msra.mxu0 0.0
      %1219 = vmatprep.subr.mxu0 0.0
      %1220 = vmatpush2.msra.mxu0 0.0
      %1221 = vmatprep.subr.mxu0 0.0
      %1222 = vmatpush2.msra.mxu0 0.0
      %1223 = vmatprep.subr.mxu0 0.0
      %1224 = vmatpush2.msra.mxu0 0.0
      %1225 = vmatprep.subr.mxu0 0.0
      %1226 = vmatpush2.msra.mxu0 0.0
      %1227 = vmatprep.subr.mxu0 0.0
      %1228 = vmatpush2.msra.mxu0 0.0
      %1229 = vmatprep.subr.mxu0 0.0
      %1230 = vmatpush2.msra.mxu0 0.0
      %1231 = vmatprep.subr.mxu0 0.0
      %1232 = vmatpush2.msra.mxu0 0.0
      %1233 = vmatprep.subr.mxu0 0.0
      %1234 = vmatpush2.msra.mxu0 0.0
      %1235 = vmatprep.subr.mxu0 0.0
      %1236 = vmatpush2.msra.mxu0 0.0
      %1237 = vmatprep.subr.mxu0 0.0
      %1238 = vmatpush2.msra.mxu0 0.0
      %1239 = vmatprep.subr.mxu0 0.0
      %1240 = vmatpush2.msra.mxu0 0.0
      %1241 = vmatprep.subr.mxu0 0.0
      %1242 = vmatpush2.msra.mxu0 0.0
      %1243 = vmatprep.subr.mxu0 0.0
      %1244 = vmatpush2.msra.mxu0 0.0
      %1245 = vmatprep.mubr.f32.mxu0 0.0
      %1246 = vmatmul.mubr.f32.gmra.mxu0 %v1173
      %v1247 = vpop.f32.mrf.mxu0
      %v1248 = vadd.f32 0.0, %v1247
      %v1249 = vpop.f32.mrf.mxu0
      %1250 = vmatprep.mubr.f32.mxu0 0.0
      %1251 = vmatmul.mubr.f32.gmra.mxu0 %v1176
      %v1252 = vpop.f32.mrf.mxu0
      %v1253 = vadd.f32 0.0, %v1252
      %v1254 = vpop.f32.mrf.mxu0
      %1255 = vdwg.mxu0
      %v1257 = vsel %vm1086, %v1082, 0
      %v1260 = vsel %vm1086, %v1083, 0
      %v1263 = vsel %vm1093, %v966, 0
      %1265 = vmatprep.subr.mxu0 0.0
      %1266 = vmatpush1.msra.mxu0 0.0
      %1267 = vmatprep.subr.mxu0 0.0
      %1268 = vmatpush1.msra.mxu0 0.0
      %1269 = vmatprep.subr.mxu0 0.0
      %1270 = vmatpush1.msra.mxu0 0.0
      %1271 = vmatprep.subr.mxu0 0.0
      %1272 = vmatpush1.msra.mxu0 0.0
      %1273 = vmatprep.subr.mxu0 0.0
      %1274 = vmatpush1.msra.mxu0 0.0
      %1275 = vmatprep.subr.mxu0 0.0
      %1276 = vmatpush1.msra.mxu0 0.0
      %1277 = vmatprep.subr.mxu0 0.0
      %1278 = vmatpush1.msra.mxu0 0.0
      %1279 = vmatprep.subr.mxu0 0.0
      %1280 = vmatpush1.msra.mxu0 0.0
      %1281 = vmatprep.subr.mxu0 0.0
      %1282 = vmatpush1.msra.mxu0 0.0
      %1283 = vmatprep.subr.mxu0 0.0
      %1284 = vmatpush1.msra.mxu0 0.0
      %1285 = vmatprep.subr.mxu0 0.0
      %1286 = vmatpush1.msra.mxu0 0.0
      %1287 = vmatprep.subr.mxu0 0.0
      %1288 = vmatpush1.msra.mxu0 0.0
      %1289 = vmatprep.subr.mxu0 0.0
      %1290 = vmatpush1.msra.mxu0 0.0
      %1291 = vmatprep.subr.mxu0 0.0
      %1292 = vmatpush1.msra.mxu0 0.0
      %1293 = vmatprep.subr.mxu0 0.0
      %1294 = vmatpush1.msra.mxu0 %v1263
      %1295 = vmatprep.subr.mxu0 0.0
      %1296 = vmatpush1.msra.mxu0 %v963
      %1297 = vmatprep.subr.mxu0 0.0
      %1298 = vmatpush2.msra.mxu0 0.0
      %1299 = vmatprep.subr.mxu0 0.0
      %1300 = vmatpush2.msra.mxu0 0.0
      %1301 = vmatprep.subr.mxu0 0.0
      %1302 = vmatpush2.msra.mxu0 0.0
      %1303 = vmatprep.subr.mxu0 0.0
      %1304 = vmatpush2.msra.mxu0 0.0
      %1305 = vmatprep.subr.mxu0 0.0
      %1306 = vmatpush2.msra.mxu0 0.0
      %1307 = vmatprep.subr.mxu0 0.0
      %1308 = vmatpush2.msra.mxu0 0.0
      %1309 = vmatprep.subr.mxu0 0.0
      %1310 = vmatpush2.msra.mxu0 0.0
      %1311 = vmatprep.subr.mxu0 0.0
      %1312 = vmatpush2.msra.mxu0 0.0
      %1313 = vmatprep.subr.mxu0 0.0
      %1314 = vmatpush2.msra.mxu0 0.0
      %1315 = vmatprep.subr.mxu0 0.0
      %1316 = vmatpush2.msra.mxu0 0.0
      %1317 = vmatprep.subr.mxu0 0.0
      %1318 = vmatpush2.msra.mxu0 0.0
      %1319 = vmatprep.subr.mxu0 0.0
      %1320 = vmatpush2.msra.mxu0 0.0
      %1321 = vmatprep.subr.mxu0 0.0
      %1322 = vmatpush2.msra.mxu0 0.0
      %1323 = vmatprep.subr.mxu0 0.0
      %1324 = vmatpush2.msra.mxu0 0.0
      %1325 = vmatprep.subr.mxu0 0.0
      %1326 = vmatpush2.msra.mxu0 0.0
      %1327 = vmatprep.subr.mxu0 0.0
      %1328 = vmatpush2.msra.mxu0 0.0
      %1329 = vmatprep.mubr.f32.mxu0 0.0
      %1330 = vmatmul.mubr.f32.gmra.mxu0 %v1257
      %v1331 = vpop.f32.mrf.mxu0
      %v1332 = vadd.f32 0.0, %v1331
      %v1333 = vpop.f32.mrf.mxu0
      %1334 = vmatprep.mubr.f32.mxu0 0.0
      %1335 = vmatmul.mubr.f32.gmra.mxu0 %v1260
      %v1336 = vpop.f32.mrf.mxu0
      %v1337 = vadd.f32 0.0, %v1336
      %v1338 = vpop.f32.mrf.mxu0
      %1339 = vdwg.mxu0
      %v1341 = vsel %vm1086, %v1084, 0
      %v1344 = vsel %vm1086, %v1085, 0
      %v1347 = vsel %vm1093, %v1016, 0
      %1349 = vmatprep.subr.mxu0 0.0
      %1350 = vmatpush1.msra.mxu0 0.0
      %1351 = vmatprep.subr.mxu0 0.0
      %1352 = vmatpush1.msra.mxu0 0.0
      %1353 = vmatprep.subr.mxu0 0.0
      %1354 = vmatpush1.msra.mxu0 0.0
      %1355 = vmatprep.subr.mxu0 0.0
      %1356 = vmatpush1.msra.mxu0 0.0
      %1357 = vmatprep.subr.mxu0 0.0
      %1358 = vmatpush1.msra.mxu0 0.0
      %1359 = vmatprep.subr.mxu0 0.0
      %1360 = vmatpush1.msra.mxu0 0.0
      %1361 = vmatprep.subr.mxu0 0.0
      %1362 = vmatpush1.msra.mxu0 0.0
      %1363 = vmatprep.subr.mxu0 0.0
      %1364 = vmatpush1.msra.mxu0 0.0
      %1365 = vmatprep.subr.mxu0 0.0
      %1366 = vmatpush1.msra.mxu0 0.0
      %1367 = vmatprep.subr.mxu0 0.0
      %1368 = vmatpush1.msra.mxu0 0.0
      %1369 = vmatprep.subr.mxu0 0.0
      %1370 = vmatpush1.msra.mxu0 0.0
      %1371 = vmatprep.subr.mxu0 0.0
      %1372 = vmatpush1.msra.mxu0 0.0
      %1373 = vmatprep.subr.mxu0 0.0
      %1374 = vmatpush1.msra.mxu0 0.0
      %1375 = vmatprep.subr.mxu0 0.0
      %1376 = vmatpush1.msra.mxu0 0.0
      %1377 = vmatprep.subr.mxu0 0.0
      %1378 = vmatpush1.msra.mxu0 %v1347
      %1379 = vmatprep.subr.mxu0 0.0
      %1380 = vmatpush1.msra.mxu0 %v1013
      %1381 = vmatprep.subr.mxu0 0.0
      %1382 = vmatpush2.msra.mxu0 0.0
      %1383 = vmatprep.subr.mxu0 0.0
      %1384 = vmatpush2.msra.mxu0 0.0
      %1385 = vmatprep.subr.mxu0 0.0
      %1386 = vmatpush2.msra.mxu0 0.0
      %1387 = vmatprep.subr.mxu0 0.0
      %1388 = vmatpush2.msra.mxu0 0.0
      %1389 = vmatprep.subr.mxu0 0.0
      %1390 = vmatpush2.msra.mxu0 0.0
      %1391 = vmatprep.subr.mxu0 0.0
      %1392 = vmatpush2.msra.mxu0 0.0
      %1393 = vmatprep.subr.mxu0 0.0
      %1394 = vmatpush2.msra.mxu0 0.0
      %1395 = vmatprep.subr.mxu0 0.0
      %1396 = vmatpush2.msra.mxu0 0.0
      %1397 = vmatprep.subr.mxu0 0.0
      %1398 = vmatpush2.msra.mxu0 0.0
      %1399 = vmatprep.subr.mxu0 0.0
      %1400 = vmatpush2.msra.mxu0 0.0
      %1401 = vmatprep.subr.mxu0 0.0
      %1402 = vmatpush2.msra.mxu0 0.0
      %1403 = vmatprep.subr.mxu0 0.0
      %1404 = vmatpush2.msra.mxu0 0.0
      %1405 = vmatprep.subr.mxu0 0.0
      %1406 = vmatpush2.msra.mxu0 0.0
      %1407 = vmatprep.subr.mxu0 0.0
      %1408 = vmatpush2.msra.mxu0 0.0
      %1409 = vmatprep.subr.mxu0 0.0
      %1410 = vmatpush2.msra.mxu0 0.0
      %1411 = vmatprep.subr.mxu0 0.0
      %1412 = vmatpush2.msra.mxu0 0.0
      %1413 = vmatprep.mubr.f32.mxu0 0.0
      %1414 = vmatmul.mubr.f32.gmra.mxu0 %v1341
      %v1415 = vpop.f32.mrf.mxu0
      %v1416 = vadd.f32 0.0, %v1415
      %v1417 = vpop.f32.mrf.mxu0
      %1418 = vmatprep.mubr.f32.mxu0 0.0
      %1419 = vmatmul.mubr.f32.gmra.mxu0 %v1344
      %v1420 = vpop.f32.mrf.mxu0
      %v1421 = vadd.f32 0.0, %v1420
      %v1422 = vpop.f32.mrf.mxu0
      %1423 = vdwg.mxu0
      %v1424 = vsel %vm1086, %v1078, -inf
      %1425 = vmax.xlane.f32.xlu0 %v1424
      %v1426 = vpop.xlane.xlu0 %1425
      %v1427 = vsel %vm1086, %v1079, -inf
      %1428 = vmax.xlane.f32.xlu0 %v1427
      %v1429 = vpop.xlane.xlu0 %1428
      %v1430 = vsel %vm1086, %v1080, -inf
      %1431 = vmax.xlane.f32.xlu0 %v1430
      %v1432 = vpop.xlane.xlu0 %1431
      %v1433 = vsel %vm1086, %v1081, -inf
      %1434 = vmax.xlane.f32.xlu0 %v1433
      %v1435 = vpop.xlane.xlu0 %1434
      %v1436 = vsel %vm1086, %v1082, -inf
      %1437 = vmax.xlane.f32.xlu0 %v1436
      %v1438 = vpop.xlane.xlu0 %1437
      %v1439 = vsel %vm1086, %v1083, -inf
      %1440 = vmax.xlane.f32.xlu0 %v1439
      %v1441 = vpop.xlane.xlu0 %1440
      %v1442 = vsel %vm1086, %v1084, -inf
      %1443 = vmax.xlane.f32.xlu0 %v1442
      %v1444 = vpop.xlane.xlu0 %1443
      %v1445 = vsel %vm1086, %v1085, -inf
      %1446 = vmax.xlane.f32.xlu0 %v1445
      %v1447 = vpop.xlane.xlu0 %1446
      %vm1448 = vcmp.gt.f32.partialorder %v1426, 0.0
      %vm1449 = vcmp.gt.f32.partialorder %v1429, 0.0
      %v1450 = vsel %vm1448, 1, 0
      %v1451 = vsel %vm1449, 1, 0
      %vm1452 = vcmp.eq.s32.totalorder %v1450, 1
      %vm1453 = vcmp.eq.s32.totalorder %v1451, 1
      %v1454 = vsel %vm1452, %v1164, %v432
      %v1455 = vsel %vm1453, %v1169, %v433
      %vm1456 = vcmp.gt.f32.partialorder %v1432, 0.0
      %vm1457 = vcmp.gt.f32.partialorder %v1435, 0.0
      %v1458 = vsel %vm1456, 1, 0
      %v1459 = vsel %vm1457, 1, 0
      %vm1460 = vcmp.eq.s32.totalorder %v1458, 1
      %vm1461 = vcmp.eq.s32.totalorder %v1459, 1
      %1464 = vrot.lane.b32.xlu0 %v432, 96
      %v1465 = vpop.permute.xlu0 %1464
      %1466 = vrot.lane.b32.xlu0 %v433, 96
      %v1467 = vpop.permute.xlu0 %1466
      %v1470 = vsel %vm1460, %v1248, %v1465
      %v1471 = vsel %vm1461, %v1253, %v1467
      %vm1472 = vcmp.gt.f32.partialorder %v1438, 0.0
      %vm1473 = vcmp.gt.f32.partialorder %v1441, 0.0
      %v1474 = vsel %vm1472, 1, 0
      %v1475 = vsel %vm1473, 1, 0
      %vm1476 = vcmp.eq.s32.totalorder %v1474, 1
      %vm1477 = vcmp.eq.s32.totalorder %v1475, 1
      %1478 = vrot.lane.b32.xlu0 %v432, 64
      %v1479 = vpop.permute.xlu0 %1478
      %1480 = vrot.lane.b32.xlu0 %v433, 64
      %v1481 = vpop.permute.xlu0 %1480
      %v1484 = vsel %vm1476, %v1332, %v1479
      %v1485 = vsel %vm1477, %v1337, %v1481
      %vm1486 = vcmp.gt.f32.partialorder %v1444, 0.0
      %vm1487 = vcmp.gt.f32.partialorder %v1447, 0.0
      %v1488 = vsel %vm1486, 1, 0
      %v1489 = vsel %vm1487, 1, 0
      %vm1490 = vcmp.eq.s32.totalorder %v1488, 1
      %vm1491 = vcmp.eq.s32.totalorder %v1489, 1
      %1492 = vrot.lane.b32.xlu0 %v432, 32
      %v1493 = vpop.permute.xlu0 %1492
      %1494 = vrot.lane.b32.xlu0 %v433, 32
      %v1495 = vpop.permute.xlu0 %1494
      %v1498 = vsel %vm1490, %v1416, %v1493
      %v1499 = vsel %vm1491, %v1421, %v1495
      %1502 = vrot.lane.b32.xlu0 %v1470, 32
      %v1503 = vpop.permute.xlu0 %1502
      %1504 = vrot.lane.b32.xlu0 %v1471, 32
      %v1505 = vpop.permute.xlu0 %1504
      %1510 = vrot.lane.b32.xlu0 %v1484, 64
      %v1511 = vpop.permute.xlu0 %1510
      %1512 = vrot.lane.b32.xlu0 %v1485, 64
      %v1513 = vpop.permute.xlu0 %1512
      %1518 = vrot.lane.b32.xlu0 %v1498, 96
      %v1519 = vpop.permute.xlu0 %1518
      %1520 = vrot.lane.b32.xlu0 %v1499, 96
      %v1521 = vpop.permute.xlu0 %1520
      %v1524 = vsel %vm444, %v1454, %v1503
      %v1525 = vsel %vm444, %v1455, %v1505
      %vm1526 = vcmask 523264
      %v1527 = vsel %vm1526, %v1524, %v1511
      %v1528 = vsel %vm1526, %v1525, %v1513
      %vm1529 = vcmask 785408
      %v1530 = vsel %vm1529, %v1527, %v1519
      %v1531 = vsel %vm1529, %v1528, %v1521
      %1532 = vst [vmem:[%s405] sm:$0xff] %v1530
      %1533 = vst [vmem:[%s405 + $0x8] sm:$0xff] %v1531
      %p1534 = scmp.lt.s32.totalorder %s20, 1
      %s1535 = scalar_select %p1534, %s20, 1
      %p1536 = scmp.lt.s32.totalorder %s21, 0
      %s1537 = scalar_select %p1536, %s21, 0
      %s1538 = smul.addr %s1537, 2
      %s1539 = smul.addr %s1535, 2
      %s1540 = sadd.s32 %s1538, %s1539
      %s1541 = smul.addr %s1540, 8
      %s1542 = scalar_lea.vmem %s5, %s1541
      // Predicated region
      $region41: #{prob_attention.3} parent=39 // pred_check
        %p1543 = pneg %p188
      $region42: #{prob_attention.3} parent=39 // pred_check_branch
        %1545 = sbr.rel (%p1543) target = $region44
      $region43: #{prob_attention.3} parent=39 // pred_region
        _
      $region44: #{prob_attention.3} parent=39 // pred_fallthru
        _
    $region40: #{prob_attention.3} parent=5 // pred_fallthru
      _
    %p1546 = scmp.le.s32.totalorder 2, %s11
    // Predicated region
    $region45: #{prob_attention.3} parent=5 // pred_check
      %p1547 = pneg %p1546
    $region46: #{prob_attention.3} parent=5 // pred_check_branch
      %1549 = sbr.rel (%p1547) target = $region48
    $region47: #{prob_attention.3} parent=5 // pred_region
      %s1550 = ssub.s32 %s11, 2
      // Predicated region
      $region49: #{prob_attention.3} parent=47 // pred_check
        %p1551 = pneg %p194
      $region50: #{prob_attention.3} parent=47 // pred_check_branch
        %1553 = sbr.rel (%p1551) target = $region52
      $region51: #{prob_attention.3} parent=47 // pred_region
        %p1554 = scmp.lt.s32.totalorder %s22, 1
        %s1555 = scalar_select %p1554, %s22, 1
        %p1556 = scmp.lt.s32.totalorder %s23, 0
        %s1557 = scalar_select %p1556, %s23, 0
        %s1558 = smul.addr %s1557, 2
        %s1559 = smul.addr %s1555, 2
        %s1560 = sadd.s32 %s1558, %s1559
        %s1561 = smul.addr %s1560, 8
        %s1562 = scalar_lea.vmem %s5, %s1561
      $region52: #{prob_attention.3} parent=47 // pred_fallthru
        _
    $region48: #{prob_attention.3} parent=5 // pred_fallthru
      _
  $region6: #{prob_attention.3} parent=0 // loop_footer
    %s15 = sadd.s32 1, %s11
  $region7: #{prob_attention.3} parent=0 // loop_footer_branch
    %10 = sbr.rel target = $region3
  $region8: #{prob_attention.3} parent=0 // loop_exit
    _

</llo_original>
